<compile_context>
chip_gen: v5e
topology: v5e:2x2
jax: 0.10.0
libtpu: 0.0.40
codegen_flags: <defaults>
</compile_context>

<pallas_src>
import functools
import math

import jax
import jax.numpy as jnp
from jax.experimental import pallas as pl
from jax.experimental.pallas import tpu as pltpu


# ------------------------------ model config ------------------------------- #
VOCAB = 100
MAX_POS = 16
TYPE_VOCAB = 2
HIDDEN = 32
NUM_HEADS = 2
HEAD_DIM = HIDDEN // NUM_HEADS
INTERMEDIATE = 64
NUM_LAYERS = 2
OUT_DIM = 30          # self.out = nn.Linear(768, 30) scaled down to Linear(32, 30)
OUT_PAD = 128         # lane-dense padded logits width (sliced back to 30 in JAX)
LN_EPS = 1e-12


# ------------------------------ kernel helpers ------------------------------ #

def _gelu(x):
    # tanh approximation of GELU.
    # TODO(synk): HuggingFace BERT default is exact erf GELU; tanh approx differs ~1e-3.
    return 0.5 * x * (1.0 + jnp.tanh(0.7978845608028654 * (x + 0.044715 * x * x * x)))


def _layer_norm(x, g, b, eps):
    mean = jnp.mean(x, axis=-1, keepdims=True)
    xc = x - mean
    var = jnp.mean(xc * xc, axis=-1, keepdims=True)
    return xc * jax.lax.rsqrt(var + eps) * g + b


# ------------------------------ fused kernel -------------------------------- #

def _bert_forward_kernel(
        x_ref, mask_ref,
        emb_ln_g_ref, emb_ln_b_ref,
        wqkv_ref, bqkv_ref, wo_ref, bo_ref,
        ln1_g_ref, ln1_b_ref, w1_ref, b1_ref, w2_ref, b2_ref,
        ln2_g_ref, ln2_b_ref,
        pooler_w_ref, pooler_b_ref, out_w_ref, out_b_ref,
        o_ref,
        *, batch, seq, num_layers, num_heads, eps):
    """Single grid step = whole batch. Everything stays in VMEM/vregs."""
    H = x_ref.shape[1]
    dh = H // num_heads

    x = x_ref[...].astype(jnp.float32)       # [B*S, H] flat activation slab
    mask = mask_ref[...]                      # [B, S] additive mask (0 / -1e4)

    # Embedding LayerNorm.
    x = _layer_norm(x, emb_ln_g_ref[...], emb_ln_b_ref[...], eps)

    for l in range(num_layers):
        # --- fused QKV projection over all B*S rows at once ---
        # (1/sqrt(dh) already folded into the Q weights at pack time)
        qkv = jnp.dot(x, wqkv_ref[l], preferred_element_type=jnp.float32) + bqkv_ref[l]
        wo_l = wo_ref[l]

        # --- self-attention: per-example / per-head static slices (no transposes) ---
        attn_blocks = []
        for b in range(batch):
            r0 = b * seq
            mask_b = mask[b:b + 1, :]                                   # [1, S]
            attn_b = jnp.zeros((seq, H), jnp.float32)
            for h in range(num_heads):
                q = qkv[r0:r0 + seq, h * dh:(h + 1) * dh]               # [S, dh]
                k = qkv[r0:r0 + seq, H + h * dh:H + (h + 1) * dh]       # [S, dh]
                v = qkv[r0:r0 + seq, 2 * H + h * dh:2 * H + (h + 1) * dh]
                # contract last dims of both operands (no k.T / transpose)
                s = jax.lax.dot_general(q, k, (((1,), (1,)), ((), ())),
                                        preferred_element_type=jnp.float32)   # [S, S]
                s = s + mask_b
                s = s - jnp.max(s, axis=-1, keepdims=True)
                p = jnp.exp(s)
                p = p * pl.reciprocal(jnp.sum(p, axis=-1, keepdims=True), approx=True)
                ctx = jnp.dot(p, v, preferred_element_type=jnp.float32)       # [S, dh]
                # head-concat + attention output projection fused as matmul-accumulate
                attn_b = attn_b + jnp.dot(ctx, wo_l[h * dh:(h + 1) * dh, :],
                                          preferred_element_type=jnp.float32)
            attn_blocks.append(attn_b)
        attn = jnp.concatenate(attn_blocks, axis=0) + bo_ref[l]          # [B*S, H]

        # --- residual + LayerNorm 1 (fused epilogue) ---
        x1 = _layer_norm(attn + x, ln1_g_ref[l], ln1_b_ref[l], eps)

        # --- feed-forward over all B*S rows at once ---
        hmid = _gelu(jnp.dot(x1, w1_ref[l], preferred_element_type=jnp.float32) + b1_ref[l])
        ffn = jnp.dot(hmid, w2_ref[l], preferred_element_type=jnp.float32) + b2_ref[l]

        # --- residual + LayerNorm 2 (fused epilogue) ---
        x = _layer_norm(ffn + x1, ln2_g_ref[l], ln2_b_ref[l], eps)

    # --- BERT pooler: tanh(W * hidden[:, 0] + b), batched over examples ---
    cls = jnp.concatenate([x[b * seq:b * seq + 1, :] for b in range(batch)], axis=0)  # [B, H]
    pooled = jnp.tanh(jnp.dot(cls, pooler_w_ref[...],
                              preferred_element_type=jnp.float32) + pooler_b_ref[...])

    # --- self.bert_drop(0.3): identity at inference; self.out: Linear (lane-padded) ---
    logits = jnp.dot(pooled, out_w_ref[...],
                     preferred_element_type=jnp.float32) + out_b_ref[...]  # [B, OUT_PAD]
    o_ref[...] = logits.astype(o_ref.dtype)


def bert_fused_forward(packed, x_emb, mask_add):
    """Single fused pallas_call over the whole network and the whole batch.

    x_emb:    [B, S, H] summed embeddings.
    mask_add: [B, S]    additive attention mask.
    """
    B, S, H = x_emb.shape
    x_flat = x_emb.reshape(B * S, H)

    weight_names = ["emb_ln_g", "emb_ln_b", "wqkv", "bqkv", "wo", "bo",
                    "ln1_g", "ln1_b", "w1", "b1", "w2", "b2", "ln2_g", "ln2_b",
                    "pooler_w", "pooler_b", "out_w", "out_b"]
    weights = [packed[n] for n in weight_names]

    def const_map(i, *, n):
        return (0,) * n

    in_specs = [
        pl.BlockSpec((B * S, H), lambda i: (0, 0)),      # flat activation slab
        pl.BlockSpec((B, S), lambda i: (0, 0)),          # additive attention mask
    ] + [pl.BlockSpec(w.shape, functools.partial(const_map, n=w.ndim)) for w in weights]

    out = pl.pallas_call(
        functools.partial(_bert_forward_kernel,
                          batch=B, seq=S,
                          num_layers=NUM_LAYERS, num_heads=NUM_HEADS, eps=LN_EPS),
        out_shape=jax.ShapeDtypeStruct((B, OUT_PAD), jnp.float32),
        grid=(1,),
        in_specs=in_specs,
        out_specs=pl.BlockSpec((B, OUT_PAD), lambda i: (0, 0)),
        compiler_params=pltpu.CompilerParams(
            dimension_semantics=("arbitrary",)),
    )(x_flat, mask_add, *weights)
    return out[:, :OUT_DIM]


# ----------------------------- parameter setup ------------------------------ #

def init_params(key):
    def nrm(k, shape):
        return 0.02 * jax.random.normal(k, shape, dtype=jnp.float32)

    keys = iter(jax.random.split(key, 8 + NUM_LAYERS * 16))
    p = {
        "word_emb": nrm(next(keys), (VOCAB, HIDDEN)),
        "pos_emb": nrm(next(keys), (MAX_POS, HIDDEN)),
        "type_emb": nrm(next(keys), (TYPE_VOCAB, HIDDEN)),
        "emb_ln_g": jnp.ones((HIDDEN,), jnp.float32),
        "emb_ln_b": jnp.zeros((HIDDEN,), jnp.float32),
        "pooler_w": nrm(next(keys), (HIDDEN, HIDDEN)),
        "pooler_b": jnp.zeros((HIDDEN,), jnp.float32),
        "out_w": nrm(next(keys), (HIDDEN, OUT_DIM)),
        "out_b": jnp.zeros((OUT_DIM,), jnp.float32),
        "layers": [],
    }
    for _ in range(NUM_LAYERS):
        p["layers"].append({
            "wq": nrm(next(keys), (HIDDEN, HIDDEN)), "bq": jnp.zeros((HIDDEN,), jnp.float32),
            "wk": nrm(next(keys), (HIDDEN, HIDDEN)), "bk": jnp.zeros((HIDDEN,), jnp.float32),
            "wv": nrm(next(keys), (HIDDEN, HIDDEN)), "bv": jnp.zeros((HIDDEN,), jnp.float32),
            "wo": nrm(next(keys), (HIDDEN, HIDDEN)), "bo": jnp.zeros((HIDDEN,), jnp.float32),
            "ln1_g": jnp.ones((HIDDEN,), jnp.float32), "ln1_b": jnp.zeros((HIDDEN,), jnp.float32),
            "w1": nrm(next(keys), (HIDDEN, INTERMEDIATE)), "b1": jnp.zeros((INTERMEDIATE,), jnp.float32),
            "w2": nrm(next(keys), (INTERMEDIATE, HIDDEN)), "b2": jnp.zeros((HIDDEN,), jnp.float32),
            "ln2_g": jnp.ones((HIDDEN,), jnp.float32), "ln2_b": jnp.zeros((HIDDEN,), jnp.float32),
        })
    return p


def pack_params(p):
    """Stack per-layer params, fuse QKV (fold 1/sqrt(dh) into Q), pad output Linear."""
    scale = 1.0 / math.sqrt(HEAD_DIM)
    stacks = {k: [] for k in ["wqkv", "bqkv", "wo", "bo", "ln1_g", "ln1_b",
                              "w1", "b1", "w2", "b2", "ln2_g", "ln2_b"]}
    for lp in p["layers"]:
        stacks["wqkv"].append(jnp.concatenate([lp["wq"] * scale, lp["wk"], lp["wv"]], axis=1))
        stacks["bqkv"].append(jnp.concatenate([lp["bq"] * scale, lp["bk"], lp["bv"]])[None, :])
        stacks["wo"].append(lp["wo"]);            stacks["bo"].append(lp["bo"][None, :])
        stacks["ln1_g"].append(lp["ln1_g"][None, :]); stacks["ln1_b"].append(lp["ln1_b"][None, :])
        stacks["w1"].append(lp["w1"]);            stacks["b1"].append(lp["b1"][None, :])
        stacks["w2"].append(lp["w2"]);            stacks["b2"].append(lp["b2"][None, :])
        stacks["ln2_g"].append(lp["ln2_g"][None, :]); stacks["ln2_b"].append(lp["ln2_b"][None, :])

    out_w_pad = jnp.zeros((HIDDEN, OUT_PAD), jnp.float32).at[:, :OUT_DIM].set(p["out_w"])
    out_b_pad = jnp.zeros((OUT_PAD,), jnp.float32).at[:OUT_DIM].set(p["out_b"])

    packed = {k: jnp.stack(v) for k, v in stacks.items()}
    packed.update({
        "word_emb": p["word_emb"], "pos_emb": p["pos_emb"], "type_emb": p["type_emb"],
        "emb_ln_g": p["emb_ln_g"][None, :], "emb_ln_b": p["emb_ln_b"][None, :],
        "pooler_w": p["pooler_w"], "pooler_b": p["pooler_b"][None, :],
        "out_w": out_w_pad, "out_b": out_b_pad[None, :],
    })
    return packed


# --------------------------------- forward ---------------------------------- #

@jax.jit
def bert_base_uncased_forward(packed, ids, mask, token_type_ids):
    """Mirrors BERTBaseUncased.forward: pooled BERT output -> dropout(eval) -> Linear."""
    B, S = ids.shape
    # Embedding gathers stay in JAX glue (integer gathers); everything else is fused.
    x = (packed["word_emb"][ids]
         + packed["pos_emb"][:S][None, :, :]
         + packed["type_emb"][token_type_ids])                      # [B, S, H]
    mask_add = (1.0 - mask.astype(jnp.float32)) * -10000.0          # [B, S]
    return bert_fused_forward(packed, x, mask_add)                  # [B, 30]


# --------------------------------- driver ------------------------------------ #

if __name__ == "__main__":
    key = jax.random.PRNGKey(0)
    k_params, k_ids, k_types = jax.random.split(key, 3)

    B, S = 2, 8
    params = init_params(k_params)
    packed = pack_params(params)

    ids = jax.random.randint(k_ids, (B, S), 0, VOCAB, dtype=jnp.int32)
    token_type_ids = jax.random.randint(k_types, (B, S), 0, TYPE_VOCAB, dtype=jnp.int32)
    # attention mask: second example has last 3 positions padded
    mask = jnp.array([[1, 1, 1, 1, 1, 1, 1, 1],
                      [1, 1, 1, 1, 1, 0, 0, 0]], dtype=jnp.int32)

    logits = bert_base_uncased_forward(packed, ids, mask, token_type_ids)
    jax.block_until_ready(logits)

    assert logits.shape == (B, OUT_DIM)
    assert logits.dtype == jnp.float32
    print("KERNEL_OK")
</pallas_src>

<mosaic_0001>
module attributes {stable_mosaic.version = 11 : i64} {
  func.func @_bert_forward_kernel(%arg0: i32, %arg1: memref<16x32xf32, #tpu.memory_space<vmem>>, %arg2: memref<2x8xf32, #tpu.memory_space<vmem>>, %arg3: memref<1x32xf32, #tpu.memory_space<vmem>>, %arg4: memref<1x32xf32, #tpu.memory_space<vmem>>, %arg5: memref<2x32x96xf32, #tpu.memory_space<vmem>>, %arg6: memref<2x1x96xf32, #tpu.memory_space<vmem>>, %arg7: memref<2x32x32xf32, #tpu.memory_space<vmem>>, %arg8: memref<2x1x32xf32, #tpu.memory_space<vmem>>, %arg9: memref<2x1x32xf32, #tpu.memory_space<vmem>>, %arg10: memref<2x1x32xf32, #tpu.memory_space<vmem>>, %arg11: memref<2x32x64xf32, #tpu.memory_space<vmem>>, %arg12: memref<2x1x64xf32, #tpu.memory_space<vmem>>, %arg13: memref<2x64x32xf32, #tpu.memory_space<vmem>>, %arg14: memref<2x1x32xf32, #tpu.memory_space<vmem>>, %arg15: memref<2x1x32xf32, #tpu.memory_space<vmem>>, %arg16: memref<2x1x32xf32, #tpu.memory_space<vmem>>, %arg17: memref<32x32xf32, #tpu.memory_space<vmem>>, %arg18: memref<1x32xf32, #tpu.memory_space<vmem>>, %arg19: memref<32x128xf32, #tpu.memory_space<vmem>>, %arg20: memref<1x128xf32, #tpu.memory_space<vmem>>, %arg21: memref<2x128xf32, #tpu.memory_space<vmem>>) attributes {dimension_semantics = [#tpu.dimension_semantics<arbitrary>], iteration_bounds = array<i64: 1>, scalar_prefetch = 0 : i64, scratch_operands = 0 : i64, tpu.core_type = #tpu.core_type<tc>, window_params = [{pipeline_mode = #tpu.pipeline_mode<synchronous>, transform_indices = @transform_0, window_bounds = array<i64: 16, 32>}, {pipeline_mode = #tpu.pipeline_mode<synchronous>, transform_indices = @transform_1, window_bounds = array<i64: 2, 8>}, {pipeline_mode = #tpu.pipeline_mode<synchronous>, transform_indices = @transform_2, window_bounds = array<i64: 1, 32>}, {pipeline_mode = #tpu.pipeline_mode<synchronous>, transform_indices = @transform_3, window_bounds = array<i64: 1, 32>}, {pipeline_mode = #tpu.pipeline_mode<synchronous>, transform_indices = @transform_4, window_bounds = array<i64: 2, 32, 96>}, {pipeline_mode = #tpu.pipeline_mode<synchronous>, transform_indices = @transform_5, window_bounds = array<i64: 2, 1, 96>}, {pipeline_mode = #tpu.pipeline_mode<synchronous>, transform_indices = @transform_6, window_bounds = array<i64: 2, 32, 32>}, {pipeline_mode = #tpu.pipeline_mode<synchronous>, transform_indices = @transform_7, window_bounds = array<i64: 2, 1, 32>}, {pipeline_mode = #tpu.pipeline_mode<synchronous>, transform_indices = @transform_8, window_bounds = array<i64: 2, 1, 32>}, {pipeline_mode = #tpu.pipeline_mode<synchronous>, transform_indices = @transform_9, window_bounds = array<i64: 2, 1, 32>}, {pipeline_mode = #tpu.pipeline_mode<synchronous>, transform_indices = @transform_10, window_bounds = array<i64: 2, 32, 64>}, {pipeline_mode = #tpu.pipeline_mode<synchronous>, transform_indices = @transform_11, window_bounds = array<i64: 2, 1, 64>}, {pipeline_mode = #tpu.pipeline_mode<synchronous>, transform_indices = @transform_12, window_bounds = array<i64: 2, 64, 32>}, {pipeline_mode = #tpu.pipeline_mode<synchronous>, transform_indices = @transform_13, window_bounds = array<i64: 2, 1, 32>}, {pipeline_mode = #tpu.pipeline_mode<synchronous>, transform_indices = @transform_14, window_bounds = array<i64: 2, 1, 32>}, {pipeline_mode = #tpu.pipeline_mode<synchronous>, transform_indices = @transform_15, window_bounds = array<i64: 2, 1, 32>}, {pipeline_mode = #tpu.pipeline_mode<synchronous>, transform_indices = @transform_16, window_bounds = array<i64: 32, 32>}, {pipeline_mode = #tpu.pipeline_mode<synchronous>, transform_indices = @transform_17, window_bounds = array<i64: 1, 32>}, {pipeline_mode = #tpu.pipeline_mode<synchronous>, transform_indices = @transform_18, window_bounds = array<i64: 32, 128>}, {pipeline_mode = #tpu.pipeline_mode<synchronous>, transform_indices = @transform_19, window_bounds = array<i64: 1, 128>}, {pipeline_mode = #tpu.pipeline_mode<synchronous>, transform_indices = @transform_20, window_bounds = array<i64: 2, 128>}]} {
    %c0 = arith.constant 0 : index
    %c0_0 = arith.constant 0 : index
    %0 = vector.load %arg1[%c0, %c0_0] : memref<16x32xf32, #tpu.memory_space<vmem>>, vector<16x32xf32>
    %c0_1 = arith.constant 0 : index
    %c0_2 = arith.constant 0 : index
    %1 = vector.load %arg2[%c0_1, %c0_2] : memref<2x8xf32, #tpu.memory_space<vmem>>, vector<2x8xf32>
    %c0_3 = arith.constant 0 : index
    %c0_4 = arith.constant 0 : index
    %2 = vector.load %arg3[%c0_3, %c0_4] : memref<1x32xf32, #tpu.memory_space<vmem>>, vector<1x32xf32>
    %c0_5 = arith.constant 0 : index
    %c0_6 = arith.constant 0 : index
    %3 = vector.load %arg4[%c0_5, %c0_6] : memref<1x32xf32, #tpu.memory_space<vmem>>, vector<1x32xf32>
    %cst = arith.constant dense<0.000000e+00> : vector<16xf32>
    %4 = vector.multi_reduction <add>, %0, %cst [1] : vector<16x32xf32> to vector<16xf32>
    %5 = vector.shape_cast %4 : vector<16xf32> to vector<16x1xf32>
    %cst_7 = arith.constant 3.200000e+01 : f32
    %6 = vector.broadcast %cst_7 : f32 to vector<16x1xf32>
    %7 = arith.divf %5, %6 : vector<16x1xf32>
    %8 = vector.broadcast %7 : vector<16x1xf32> to vector<16x32xf32>
    %9 = arith.subf %0, %8 : vector<16x32xf32>
    %10 = arith.mulf %9, %9 : vector<16x32xf32>
    %cst_8 = arith.constant dense<0.000000e+00> : vector<16xf32>
    %11 = vector.multi_reduction <add>, %10, %cst_8 [1] : vector<16x32xf32> to vector<16xf32>
    %12 = vector.shape_cast %11 : vector<16xf32> to vector<16x1xf32>
    %cst_9 = arith.constant 3.200000e+01 : f32
    %13 = vector.broadcast %cst_9 : f32 to vector<16x1xf32>
    %14 = arith.divf %12, %13 : vector<16x1xf32>
    %cst_10 = arith.constant 9.99999996E-13 : f32
    %15 = vector.broadcast %cst_10 : f32 to vector<16x1xf32>
    %16 = arith.addf %14, %15 : vector<16x1xf32>
    %17 = math.rsqrt %16 : vector<16x1xf32>
    %18 = vector.broadcast %17 : vector<16x1xf32> to vector<16x32xf32>
    %19 = arith.mulf %9, %18 : vector<16x32xf32>
    %20 = vector.broadcast %2 : vector<1x32xf32> to vector<16x32xf32>
    %21 = arith.mulf %19, %20 : vector<16x32xf32>
    %22 = vector.broadcast %3 : vector<1x32xf32> to vector<16x32xf32>
    %23 = arith.addf %21, %22 : vector<16x32xf32>
    %c0_11 = arith.constant 0 : index
    %c0_12 = arith.constant 0 : index
    %c0_13 = arith.constant 0 : index
    %24 = vector.load %arg5[%c0_11, %c0_12, %c0_13] : memref<2x32x96xf32, #tpu.memory_space<vmem>>, vector<1x32x96xf32>
    %25 = vector.shape_cast %24 : vector<1x32x96xf32> to vector<32x96xf32>
    %cst_14 = arith.constant dense<0.000000e+00> : vector<16x96xf32>
    %26 = tpu.matmul %23, %25, %cst_14 {dimension_numbers = #tpu.dot_dimension_numbers<[1], [0], [0], [1], [0, 0, 1, 1], [], []>} : vector<16x32xf32>, vector<32x96xf32>, vector<16x96xf32> -> vector<16x96xf32>
    %c0_15 = arith.constant 0 : index
    %c0_16 = arith.constant 0 : index
    %c0_17 = arith.constant 0 : index
    %27 = vector.load %arg6[%c0_15, %c0_16, %c0_17] : memref<2x1x96xf32, #tpu.memory_space<vmem>>, vector<1x1x96xf32>
    %28 = vector.shape_cast %27 : vector<1x1x96xf32> to vector<1x96xf32>
    %29 = vector.broadcast %28 : vector<1x96xf32> to vector<16x96xf32>
    %30 = arith.addf %26, %29 : vector<16x96xf32>
    %c0_18 = arith.constant 0 : index
    %c0_19 = arith.constant 0 : index
    %c0_20 = arith.constant 0 : index
    %31 = vector.load %arg7[%c0_18, %c0_19, %c0_20] : memref<2x32x32xf32, #tpu.memory_space<vmem>>, vector<1x32x32xf32>
    %32 = vector.shape_cast %31 : vector<1x32x32xf32> to vector<32x32xf32>
    %33 = vector.extract_strided_slice %1 {offsets = [0, 0], sizes = [1, 8], strides = [1, 1]} : vector<2x8xf32> to vector<1x8xf32>
    %cst_21 = arith.constant 0.000000e+00 : f32
    %34 = vector.broadcast %cst_21 : f32 to vector<8x32xf32>
    %35 = vector.extract_strided_slice %30 {offsets = [0, 0], sizes = [8, 16], strides = [1, 1]} : vector<16x96xf32> to vector<8x16xf32>
    %36 = vector.extract_strided_slice %30 {offsets = [0, 32], sizes = [8, 16], strides = [1, 1]} : vector<16x96xf32> to vector<8x16xf32>
    %37 = vector.extract_strided_slice %30 {offsets = [0, 64], sizes = [8, 16], strides = [1, 1]} : vector<16x96xf32> to vector<8x16xf32>
    %cst_22 = arith.constant dense<0.000000e+00> : vector<8x8xf32>
    %38 = tpu.matmul %35, %36, %cst_22 {dimension_numbers = #tpu.dot_dimension_numbers<[1], [1], [0], [0], [0, 0, 1, 0], [], []>} : vector<8x16xf32>, vector<8x16xf32>, vector<8x8xf32> -> vector<8x8xf32>
    %39 = vector.broadcast %33 : vector<1x8xf32> to vector<8x8xf32>
    %40 = arith.addf %38, %39 : vector<8x8xf32>
    %cst_23 = arith.constant dense<0xFF800000> : vector<8xf32>
    %41 = vector.multi_reduction <maximumf>, %40, %cst_23 [1] : vector<8x8xf32> to vector<8xf32>
    %42 = vector.shape_cast %41 : vector<8xf32> to vector<8x1xf32>
    %43 = vector.broadcast %42 : vector<8x1xf32> to vector<8x8xf32>
    %44 = arith.subf %40, %43 : vector<8x8xf32>
    %45 = math.exp %44 : vector<8x8xf32>
    %cst_24 = arith.constant dense<0.000000e+00> : vector<8xf32>
    %46 = vector.multi_reduction <add>, %45, %cst_24 [1] : vector<8x8xf32> to vector<8xf32>
    %47 = vector.shape_cast %46 : vector<8xf32> to vector<8x1xf32>
    %48 = tpu.reciprocal %47 {approx = true} : vector<8x1xf32> -> vector<8x1xf32>
    %49 = vector.broadcast %48 : vector<8x1xf32> to vector<8x8xf32>
    %50 = arith.mulf %45, %49 : vector<8x8xf32>
    %cst_25 = arith.constant dense<0.000000e+00> : vector<8x16xf32>
    %51 = tpu.matmul %50, %37, %cst_25 {dimension_numbers = #tpu.dot_dimension_numbers<[1], [0], [0], [1], [0, 0, 1, 1], [], []>} : vector<8x8xf32>, vector<8x16xf32>, vector<8x16xf32> -> vector<8x16xf32>
    %52 = vector.extract_strided_slice %32 {offsets = [0, 0], sizes = [16, 32], strides = [1, 1]} : vector<32x32xf32> to vector<16x32xf32>
    %cst_26 = arith.constant dense<0.000000e+00> : vector<8x32xf32>
    %53 = tpu.matmul %51, %52, %cst_26 {dimension_numbers = #tpu.dot_dimension_numbers<[1], [0], [0], [1], [0, 0, 1, 1], [], []>} : vector<8x16xf32>, vector<16x32xf32>, vector<8x32xf32> -> vector<8x32xf32>
    %54 = arith.addf %34, %53 : vector<8x32xf32>
    %55 = vector.extract_strided_slice %30 {offsets = [0, 16], sizes = [8, 16], strides = [1, 1]} : vector<16x96xf32> to vector<8x16xf32>
    %56 = vector.extract_strided_slice %30 {offsets = [0, 48], sizes = [8, 16], strides = [1, 1]} : vector<16x96xf32> to vector<8x16xf32>
    %57 = vector.extract_strided_slice %30 {offsets = [0, 80], sizes = [8, 16], strides = [1, 1]} : vector<16x96xf32> to vector<8x16xf32>
    %cst_27 = arith.constant dense<0.000000e+00> : vector<8x8xf32>
    %58 = tpu.matmul %55, %56, %cst_27 {dimension_numbers = #tpu.dot_dimension_numbers<[1], [1], [0], [0], [0, 0, 1, 0], [], []>} : vector<8x16xf32>, vector<8x16xf32>, vector<8x8xf32> -> vector<8x8xf32>
    %59 = vector.broadcast %33 : vector<1x8xf32> to vector<8x8xf32>
    %60 = arith.addf %58, %59 : vector<8x8xf32>
    %cst_28 = arith.constant dense<0xFF800000> : vector<8xf32>
    %61 = vector.multi_reduction <maximumf>, %60, %cst_28 [1] : vector<8x8xf32> to vector<8xf32>
    %62 = vector.shape_cast %61 : vector<8xf32> to vector<8x1xf32>
    %63 = vector.broadcast %62 : vector<8x1xf32> to vector<8x8xf32>
    %64 = arith.subf %60, %63 : vector<8x8xf32>
    %65 = math.exp %64 : vector<8x8xf32>
    %cst_29 = arith.constant dense<0.000000e+00> : vector<8xf32>
    %66 = vector.multi_reduction <add>, %65, %cst_29 [1] : vector<8x8xf32> to vector<8xf32>
    %67 = vector.shape_cast %66 : vector<8xf32> to vector<8x1xf32>
    %68 = tpu.reciprocal %67 {approx = true} : vector<8x1xf32> -> vector<8x1xf32>
    %69 = vector.broadcast %68 : vector<8x1xf32> to vector<8x8xf32>
    %70 = arith.mulf %65, %69 : vector<8x8xf32>
    %cst_30 = arith.constant dense<0.000000e+00> : vector<8x16xf32>
    %71 = tpu.matmul %70, %57, %cst_30 {dimension_numbers = #tpu.dot_dimension_numbers<[1], [0], [0], [1], [0, 0, 1, 1], [], []>} : vector<8x8xf32>, vector<8x16xf32>, vector<8x16xf32> -> vector<8x16xf32>
    %72 = vector.extract_strided_slice %32 {offsets = [16, 0], sizes = [16, 32], strides = [1, 1]} : vector<32x32xf32> to vector<16x32xf32>
    %cst_31 = arith.constant dense<0.000000e+00> : vector<8x32xf32>
    %73 = tpu.matmul %71, %72, %cst_31 {dimension_numbers = #tpu.dot_dimension_numbers<[1], [0], [0], [1], [0, 0, 1, 1], [], []>} : vector<8x16xf32>, vector<16x32xf32>, vector<8x32xf32> -> vector<8x32xf32>
    %74 = arith.addf %54, %73 : vector<8x32xf32>
    %75 = vector.extract_strided_slice %1 {offsets = [1, 0], sizes = [1, 8], strides = [1, 1]} : vector<2x8xf32> to vector<1x8xf32>
    %cst_32 = arith.constant 0.000000e+00 : f32
    %76 = vector.broadcast %cst_32 : f32 to vector<8x32xf32>
    %77 = vector.extract_strided_slice %30 {offsets = [8, 0], sizes = [8, 16], strides = [1, 1]} : vector<16x96xf32> to vector<8x16xf32>
    %78 = vector.extract_strided_slice %30 {offsets = [8, 32], sizes = [8, 16], strides = [1, 1]} : vector<16x96xf32> to vector<8x16xf32>
    %79 = vector.extract_strided_slice %30 {offsets = [8, 64], sizes = [8, 16], strides = [1, 1]} : vector<16x96xf32> to vector<8x16xf32>
    %cst_33 = arith.constant dense<0.000000e+00> : vector<8x8xf32>
    %80 = tpu.matmul %77, %78, %cst_33 {dimension_numbers = #tpu.dot_dimension_numbers<[1], [1], [0], [0], [0, 0, 1, 0], [], []>} : vector<8x16xf32>, vector<8x16xf32>, vector<8x8xf32> -> vector<8x8xf32>
    %81 = vector.broadcast %75 : vector<1x8xf32> to vector<8x8xf32>
    %82 = arith.addf %80, %81 : vector<8x8xf32>
    %cst_34 = arith.constant dense<0xFF800000> : vector<8xf32>
    %83 = vector.multi_reduction <maximumf>, %82, %cst_34 [1] : vector<8x8xf32> to vector<8xf32>
    %84 = vector.shape_cast %83 : vector<8xf32> to vector<8x1xf32>
    %85 = vector.broadcast %84 : vector<8x1xf32> to vector<8x8xf32>
    %86 = arith.subf %82, %85 : vector<8x8xf32>
    %87 = math.exp %86 : vector<8x8xf32>
    %cst_35 = arith.constant dense<0.000000e+00> : vector<8xf32>
    %88 = vector.multi_reduction <add>, %87, %cst_35 [1] : vector<8x8xf32> to vector<8xf32>
    %89 = vector.shape_cast %88 : vector<8xf32> to vector<8x1xf32>
    %90 = tpu.reciprocal %89 {approx = true} : vector<8x1xf32> -> vector<8x1xf32>
    %91 = vector.broadcast %90 : vector<8x1xf32> to vector<8x8xf32>
    %92 = arith.mulf %87, %91 : vector<8x8xf32>
    %cst_36 = arith.constant dense<0.000000e+00> : vector<8x16xf32>
    %93 = tpu.matmul %92, %79, %cst_36 {dimension_numbers = #tpu.dot_dimension_numbers<[1], [0], [0], [1], [0, 0, 1, 1], [], []>} : vector<8x8xf32>, vector<8x16xf32>, vector<8x16xf32> -> vector<8x16xf32>
    %94 = vector.extract_strided_slice %32 {offsets = [0, 0], sizes = [16, 32], strides = [1, 1]} : vector<32x32xf32> to vector<16x32xf32>
    %cst_37 = arith.constant dense<0.000000e+00> : vector<8x32xf32>
    %95 = tpu.matmul %93, %94, %cst_37 {dimension_numbers = #tpu.dot_dimension_numbers<[1], [0], [0], [1], [0, 0, 1, 1], [], []>} : vector<8x16xf32>, vector<16x32xf32>, vector<8x32xf32> -> vector<8x32xf32>
    %96 = arith.addf %76, %95 : vector<8x32xf32>
    %97 = vector.extract_strided_slice %30 {offsets = [8, 16], sizes = [8, 16], strides = [1, 1]} : vector<16x96xf32> to vector<8x16xf32>
    %98 = vector.extract_strided_slice %30 {offsets = [8, 48], sizes = [8, 16], strides = [1, 1]} : vector<16x96xf32> to vector<8x16xf32>
    %99 = vector.extract_strided_slice %30 {offsets = [8, 80], sizes = [8, 16], strides = [1, 1]} : vector<16x96xf32> to vector<8x16xf32>
    %cst_38 = arith.constant dense<0.000000e+00> : vector<8x8xf32>
    %100 = tpu.matmul %97, %98, %cst_38 {dimension_numbers = #tpu.dot_dimension_numbers<[1], [1], [0], [0], [0, 0, 1, 0], [], []>} : vector<8x16xf32>, vector<8x16xf32>, vector<8x8xf32> -> vector<8x8xf32>
    %101 = vector.broadcast %75 : vector<1x8xf32> to vector<8x8xf32>
    %102 = arith.addf %100, %101 : vector<8x8xf32>
    %cst_39 = arith.constant dense<0xFF800000> : vector<8xf32>
    %103 = vector.multi_reduction <maximumf>, %102, %cst_39 [1] : vector<8x8xf32> to vector<8xf32>
    %104 = vector.shape_cast %103 : vector<8xf32> to vector<8x1xf32>
    %105 = vector.broadcast %104 : vector<8x1xf32> to vector<8x8xf32>
    %106 = arith.subf %102, %105 : vector<8x8xf32>
    %107 = math.exp %106 : vector<8x8xf32>
    %cst_40 = arith.constant dense<0.000000e+00> : vector<8xf32>
    %108 = vector.multi_reduction <add>, %107, %cst_40 [1] : vector<8x8xf32> to vector<8xf32>
    %109 = vector.shape_cast %108 : vector<8xf32> to vector<8x1xf32>
    %110 = tpu.reciprocal %109 {approx = true} : vector<8x1xf32> -> vector<8x1xf32>
    %111 = vector.broadcast %110 : vector<8x1xf32> to vector<8x8xf32>
    %112 = arith.mulf %107, %111 : vector<8x8xf32>
    %cst_41 = arith.constant dense<0.000000e+00> : vector<8x16xf32>
    %113 = tpu.matmul %112, %99, %cst_41 {dimension_numbers = #tpu.dot_dimension_numbers<[1], [0], [0], [1], [0, 0, 1, 1], [], []>} : vector<8x8xf32>, vector<8x16xf32>, vector<8x16xf32> -> vector<8x16xf32>
    %114 = vector.extract_strided_slice %32 {offsets = [16, 0], sizes = [16, 32], strides = [1, 1]} : vector<32x32xf32> to vector<16x32xf32>
    %cst_42 = arith.constant dense<0.000000e+00> : vector<8x32xf32>
    %115 = tpu.matmul %113, %114, %cst_42 {dimension_numbers = #tpu.dot_dimension_numbers<[1], [0], [0], [1], [0, 0, 1, 1], [], []>} : vector<8x16xf32>, vector<16x32xf32>, vector<8x32xf32> -> vector<8x32xf32>
    %116 = arith.addf %96, %115 : vector<8x32xf32>
    %117 = tpu.concatenate %74, %116 in 0 : vector<8x32xf32>, vector<8x32xf32> -> vector<16x32xf32>
    %c0_43 = arith.constant 0 : index
    %c0_44 = arith.constant 0 : index
    %c0_45 = arith.constant 0 : index
    %118 = vector.load %arg8[%c0_43, %c0_44, %c0_45] : memref<2x1x32xf32, #tpu.memory_space<vmem>>, vector<1x1x32xf32>
    %119 = vector.shape_cast %118 : vector<1x1x32xf32> to vector<1x32xf32>
    %120 = vector.broadcast %119 : vector<1x32xf32> to vector<16x32xf32>
    %121 = arith.addf %117, %120 : vector<16x32xf32>
    %122 = arith.addf %121, %23 : vector<16x32xf32>
    %c0_46 = arith.constant 0 : index
    %c0_47 = arith.constant 0 : index
    %c0_48 = arith.constant 0 : index
    %123 = vector.load %arg9[%c0_46, %c0_47, %c0_48] : memref<2x1x32xf32, #tpu.memory_space<vmem>>, vector<1x1x32xf32>
    %124 = vector.shape_cast %123 : vector<1x1x32xf32> to vector<1x32xf32>
    %c0_49 = arith.constant 0 : index
    %c0_50 = arith.constant 0 : index
    %c0_51 = arith.constant 0 : index
    %125 = vector.load %arg10[%c0_49, %c0_50, %c0_51] : memref<2x1x32xf32, #tpu.memory_space<vmem>>, vector<1x1x32xf32>
    %126 = vector.shape_cast %125 : vector<1x1x32xf32> to vector<1x32xf32>
    %cst_52 = arith.constant dense<0.000000e+00> : vector<16xf32>
    %127 = vector.multi_reduction <add>, %122, %cst_52 [1] : vector<16x32xf32> to vector<16xf32>
    %128 = vector.shape_cast %127 : vector<16xf32> to vector<16x1xf32>
    %cst_53 = arith.constant 3.200000e+01 : f32
    %129 = vector.broadcast %cst_53 : f32 to vector<16x1xf32>
    %130 = arith.divf %128, %129 : vector<16x1xf32>
    %131 = vector.broadcast %130 : vector<16x1xf32> to vector<16x32xf32>
    %132 = arith.subf %122, %131 : vector<16x32xf32>
    %133 = arith.mulf %132, %132 : vector<16x32xf32>
    %cst_54 = arith.constant dense<0.000000e+00> : vector<16xf32>
    %134 = vector.multi_reduction <add>, %133, %cst_54 [1] : vector<16x32xf32> to vector<16xf32>
    %135 = vector.shape_cast %134 : vector<16xf32> to vector<16x1xf32>
    %cst_55 = arith.constant 3.200000e+01 : f32
    %136 = vector.broadcast %cst_55 : f32 to vector<16x1xf32>
    %137 = arith.divf %135, %136 : vector<16x1xf32>
    %cst_56 = arith.constant 9.99999996E-13 : f32
    %138 = vector.broadcast %cst_56 : f32 to vector<16x1xf32>
    %139 = arith.addf %137, %138 : vector<16x1xf32>
    %140 = math.rsqrt %139 : vector<16x1xf32>
    %141 = vector.broadcast %140 : vector<16x1xf32> to vector<16x32xf32>
    %142 = arith.mulf %132, %141 : vector<16x32xf32>
    %143 = vector.broadcast %124 : vector<1x32xf32> to vector<16x32xf32>
    %144 = arith.mulf %142, %143 : vector<16x32xf32>
    %145 = vector.broadcast %126 : vector<1x32xf32> to vector<16x32xf32>
    %146 = arith.addf %144, %145 : vector<16x32xf32>
    %c0_57 = arith.constant 0 : index
    %c0_58 = arith.constant 0 : index
    %c0_59 = arith.constant 0 : index
    %147 = vector.load %arg11[%c0_57, %c0_58, %c0_59] : memref<2x32x64xf32, #tpu.memory_space<vmem>>, vector<1x32x64xf32>
    %148 = vector.shape_cast %147 : vector<1x32x64xf32> to vector<32x64xf32>
    %cst_60 = arith.constant dense<0.000000e+00> : vector<16x64xf32>
    %149 = tpu.matmul %146, %148, %cst_60 {dimension_numbers = #tpu.dot_dimension_numbers<[1], [0], [0], [1], [0, 0, 1, 1], [], []>} : vector<16x32xf32>, vector<32x64xf32>, vector<16x64xf32> -> vector<16x64xf32>
    %c0_61 = arith.constant 0 : index
    %c0_62 = arith.constant 0 : index
    %c0_63 = arith.constant 0 : index
    %150 = vector.load %arg12[%c0_61, %c0_62, %c0_63] : memref<2x1x64xf32, #tpu.memory_space<vmem>>, vector<1x1x64xf32>
    %151 = vector.shape_cast %150 : vector<1x1x64xf32> to vector<1x64xf32>
    %152 = vector.broadcast %151 : vector<1x64xf32> to vector<16x64xf32>
    %153 = arith.addf %149, %152 : vector<16x64xf32>
    %cst_64 = arith.constant 5.000000e-01 : f32
    %154 = vector.broadcast %cst_64 : f32 to vector<16x64xf32>
    %155 = arith.mulf %154, %153 : vector<16x64xf32>
    %cst_65 = arith.constant 4.471500e-02 : f32
    %156 = vector.broadcast %cst_65 : f32 to vector<16x64xf32>
    %157 = arith.mulf %156, %153 : vector<16x64xf32>
    %158 = arith.mulf %157, %153 : vector<16x64xf32>
    %159 = arith.mulf %158, %153 : vector<16x64xf32>
    %160 = arith.addf %153, %159 : vector<16x64xf32>
    %cst_66 = arith.constant 0.797884583 : f32
    %161 = vector.broadcast %cst_66 : f32 to vector<16x64xf32>
    %162 = arith.mulf %161, %160 : vector<16x64xf32>
    %163 = math.tanh %162 : vector<16x64xf32>
    %cst_67 = arith.constant 1.000000e+00 : f32
    %164 = vector.broadcast %cst_67 : f32 to vector<16x64xf32>
    %165 = arith.addf %164, %163 : vector<16x64xf32>
    %166 = arith.mulf %155, %165 : vector<16x64xf32>
    %c0_68 = arith.constant 0 : index
    %c0_69 = arith.constant 0 : index
    %c0_70 = arith.constant 0 : index
    %167 = vector.load %arg13[%c0_68, %c0_69, %c0_70] : memref<2x64x32xf32, #tpu.memory_space<vmem>>, vector<1x64x32xf32>
    %168 = vector.shape_cast %167 : vector<1x64x32xf32> to vector<64x32xf32>
    %cst_71 = arith.constant dense<0.000000e+00> : vector<16x32xf32>
    %169 = tpu.matmul %166, %168, %cst_71 {dimension_numbers = #tpu.dot_dimension_numbers<[1], [0], [0], [1], [0, 0, 1, 1], [], []>} : vector<16x64xf32>, vector<64x32xf32>, vector<16x32xf32> -> vector<16x32xf32>
    %c0_72 = arith.constant 0 : index
    %c0_73 = arith.constant 0 : index
    %c0_74 = arith.constant 0 : index
    %170 = vector.load %arg14[%c0_72, %c0_73, %c0_74] : memref<2x1x32xf32, #tpu.memory_space<vmem>>, vector<1x1x32xf32>
    %171 = vector.shape_cast %170 : vector<1x1x32xf32> to vector<1x32xf32>
    %172 = vector.broadcast %171 : vector<1x32xf32> to vector<16x32xf32>
    %173 = arith.addf %169, %172 : vector<16x32xf32>
    %174 = arith.addf %173, %146 : vector<16x32xf32>
    %c0_75 = arith.constant 0 : index
    %c0_76 = arith.constant 0 : index
    %c0_77 = arith.constant 0 : index
    %175 = vector.load %arg15[%c0_75, %c0_76, %c0_77] : memref<2x1x32xf32, #tpu.memory_space<vmem>>, vector<1x1x32xf32>
    %176 = vector.shape_cast %175 : vector<1x1x32xf32> to vector<1x32xf32>
    %c0_78 = arith.constant 0 : index
    %c0_79 = arith.constant 0 : index
    %c0_80 = arith.constant 0 : index
    %177 = vector.load %arg16[%c0_78, %c0_79, %c0_80] : memref<2x1x32xf32, #tpu.memory_space<vmem>>, vector<1x1x32xf32>
    %178 = vector.shape_cast %177 : vector<1x1x32xf32> to vector<1x32xf32>
    %cst_81 = arith.constant dense<0.000000e+00> : vector<16xf32>
    %179 = vector.multi_reduction <add>, %174, %cst_81 [1] : vector<16x32xf32> to vector<16xf32>
    %180 = vector.shape_cast %179 : vector<16xf32> to vector<16x1xf32>
    %cst_82 = arith.constant 3.200000e+01 : f32
    %181 = vector.broadcast %cst_82 : f32 to vector<16x1xf32>
    %182 = arith.divf %180, %181 : vector<16x1xf32>
    %183 = vector.broadcast %182 : vector<16x1xf32> to vector<16x32xf32>
    %184 = arith.subf %174, %183 : vector<16x32xf32>
    %185 = arith.mulf %184, %184 : vector<16x32xf32>
    %cst_83 = arith.constant dense<0.000000e+00> : vector<16xf32>
    %186 = vector.multi_reduction <add>, %185, %cst_83 [1] : vector<16x32xf32> to vector<16xf32>
    %187 = vector.shape_cast %186 : vector<16xf32> to vector<16x1xf32>
    %cst_84 = arith.constant 3.200000e+01 : f32
    %188 = vector.broadcast %cst_84 : f32 to vector<16x1xf32>
    %189 = arith.divf %187, %188 : vector<16x1xf32>
    %cst_85 = arith.constant 9.99999996E-13 : f32
    %190 = vector.broadcast %cst_85 : f32 to vector<16x1xf32>
    %191 = arith.addf %189, %190 : vector<16x1xf32>
    %192 = math.rsqrt %191 : vector<16x1xf32>
    %193 = vector.broadcast %192 : vector<16x1xf32> to vector<16x32xf32>
    %194 = arith.mulf %184, %193 : vector<16x32xf32>
    %195 = vector.broadcast %176 : vector<1x32xf32> to vector<16x32xf32>
    %196 = arith.mulf %194, %195 : vector<16x32xf32>
    %197 = vector.broadcast %178 : vector<1x32xf32> to vector<16x32xf32>
    %198 = arith.addf %196, %197 : vector<16x32xf32>
    %c1 = arith.constant 1 : index
    %c0_86 = arith.constant 0 : index
    %c0_87 = arith.constant 0 : index
    %199 = vector.load %arg5[%c1, %c0_86, %c0_87] : memref<2x32x96xf32, #tpu.memory_space<vmem>>, vector<1x32x96xf32>
    %200 = vector.shape_cast %199 : vector<1x32x96xf32> to vector<32x96xf32>
    %cst_88 = arith.constant dense<0.000000e+00> : vector<16x96xf32>
    %201 = tpu.matmul %198, %200, %cst_88 {dimension_numbers = #tpu.dot_dimension_numbers<[1], [0], [0], [1], [0, 0, 1, 1], [], []>} : vector<16x32xf32>, vector<32x96xf32>, vector<16x96xf32> -> vector<16x96xf32>
    %c1_89 = arith.constant 1 : index
    %c0_90 = arith.constant 0 : index
    %c0_91 = arith.constant 0 : index
    %202 = vector.load %arg6[%c1_89, %c0_90, %c0_91] : memref<2x1x96xf32, #tpu.memory_space<vmem>>, vector<1x1x96xf32>
    %203 = vector.shape_cast %202 : vector<1x1x96xf32> to vector<1x96xf32>
    %204 = vector.broadcast %203 : vector<1x96xf32> to vector<16x96xf32>
    %205 = arith.addf %201, %204 : vector<16x96xf32>
    %c1_92 = arith.constant 1 : index
    %c0_93 = arith.constant 0 : index
    %c0_94 = arith.constant 0 : index
    %206 = vector.load %arg7[%c1_92, %c0_93, %c0_94] : memref<2x32x32xf32, #tpu.memory_space<vmem>>, vector<1x32x32xf32>
    %207 = vector.shape_cast %206 : vector<1x32x32xf32> to vector<32x32xf32>
    %208 = vector.extract_strided_slice %1 {offsets = [0, 0], sizes = [1, 8], strides = [1, 1]} : vector<2x8xf32> to vector<1x8xf32>
    %cst_95 = arith.constant 0.000000e+00 : f32
    %209 = vector.broadcast %cst_95 : f32 to vector<8x32xf32>
    %210 = vector.extract_strided_slice %205 {offsets = [0, 0], sizes = [8, 16], strides = [1, 1]} : vector<16x96xf32> to vector<8x16xf32>
    %211 = vector.extract_strided_slice %205 {offsets = [0, 32], sizes = [8, 16], strides = [1, 1]} : vector<16x96xf32> to vector<8x16xf32>
    %212 = vector.extract_strided_slice %205 {offsets = [0, 64], sizes = [8, 16], strides = [1, 1]} : vector<16x96xf32> to vector<8x16xf32>
    %cst_96 = arith.constant dense<0.000000e+00> : vector<8x8xf32>
    %213 = tpu.matmul %210, %211, %cst_96 {dimension_numbers = #tpu.dot_dimension_numbers<[1], [1], [0], [0], [0, 0, 1, 0], [], []>} : vector<8x16xf32>, vector<8x16xf32>, vector<8x8xf32> -> vector<8x8xf32>
    %214 = vector.broadcast %208 : vector<1x8xf32> to vector<8x8xf32>
    %215 = arith.addf %213, %214 : vector<8x8xf32>
    %cst_97 = arith.constant dense<0xFF800000> : vector<8xf32>
    %216 = vector.multi_reduction <maximumf>, %215, %cst_97 [1] : vector<8x8xf32> to vector<8xf32>
    %217 = vector.shape_cast %216 : vector<8xf32> to vector<8x1xf32>
    %218 = vector.broadcast %217 : vector<8x1xf32> to vector<8x8xf32>
    %219 = arith.subf %215, %218 : vector<8x8xf32>
    %220 = math.exp %219 : vector<8x8xf32>
    %cst_98 = arith.constant dense<0.000000e+00> : vector<8xf32>
    %221 = vector.multi_reduction <add>, %220, %cst_98 [1] : vector<8x8xf32> to vector<8xf32>
    %222 = vector.shape_cast %221 : vector<8xf32> to vector<8x1xf32>
    %223 = tpu.reciprocal %222 {approx = true} : vector<8x1xf32> -> vector<8x1xf32>
    %224 = vector.broadcast %223 : vector<8x1xf32> to vector<8x8xf32>
    %225 = arith.mulf %220, %224 : vector<8x8xf32>
    %cst_99 = arith.constant dense<0.000000e+00> : vector<8x16xf32>
    %226 = tpu.matmul %225, %212, %cst_99 {dimension_numbers = #tpu.dot_dimension_numbers<[1], [0], [0], [1], [0, 0, 1, 1], [], []>} : vector<8x8xf32>, vector<8x16xf32>, vector<8x16xf32> -> vector<8x16xf32>
    %227 = vector.extract_strided_slice %207 {offsets = [0, 0], sizes = [16, 32], strides = [1, 1]} : vector<32x32xf32> to vector<16x32xf32>
    %cst_100 = arith.constant dense<0.000000e+00> : vector<8x32xf32>
    %228 = tpu.matmul %226, %227, %cst_100 {dimension_numbers = #tpu.dot_dimension_numbers<[1], [0], [0], [1], [0, 0, 1, 1], [], []>} : vector<8x16xf32>, vector<16x32xf32>, vector<8x32xf32> -> vector<8x32xf32>
    %229 = arith.addf %209, %228 : vector<8x32xf32>
    %230 = vector.extract_strided_slice %205 {offsets = [0, 16], sizes = [8, 16], strides = [1, 1]} : vector<16x96xf32> to vector<8x16xf32>
    %231 = vector.extract_strided_slice %205 {offsets = [0, 48], sizes = [8, 16], strides = [1, 1]} : vector<16x96xf32> to vector<8x16xf32>
    %232 = vector.extract_strided_slice %205 {offsets = [0, 80], sizes = [8, 16], strides = [1, 1]} : vector<16x96xf32> to vector<8x16xf32>
    %cst_101 = arith.constant dense<0.000000e+00> : vector<8x8xf32>
    %233 = tpu.matmul %230, %231, %cst_101 {dimension_numbers = #tpu.dot_dimension_numbers<[1], [1], [0], [0], [0, 0, 1, 0], [], []>} : vector<8x16xf32>, vector<8x16xf32>, vector<8x8xf32> -> vector<8x8xf32>
    %234 = vector.broadcast %208 : vector<1x8xf32> to vector<8x8xf32>
    %235 = arith.addf %233, %234 : vector<8x8xf32>
    %cst_102 = arith.constant dense<0xFF800000> : vector<8xf32>
    %236 = vector.multi_reduction <maximumf>, %235, %cst_102 [1] : vector<8x8xf32> to vector<8xf32>
    %237 = vector.shape_cast %236 : vector<8xf32> to vector<8x1xf32>
    %238 = vector.broadcast %237 : vector<8x1xf32> to vector<8x8xf32>
    %239 = arith.subf %235, %238 : vector<8x8xf32>
    %240 = math.exp %239 : vector<8x8xf32>
    %cst_103 = arith.constant dense<0.000000e+00> : vector<8xf32>
    %241 = vector.multi_reduction <add>, %240, %cst_103 [1] : vector<8x8xf32> to vector<8xf32>
    %242 = vector.shape_cast %241 : vector<8xf32> to vector<8x1xf32>
    %243 = tpu.reciprocal %242 {approx = true} : vector<8x1xf32> -> vector<8x1xf32>
    %244 = vector.broadcast %243 : vector<8x1xf32> to vector<8x8xf32>
    %245 = arith.mulf %240, %244 : vector<8x8xf32>
    %cst_104 = arith.constant dense<0.000000e+00> : vector<8x16xf32>
    %246 = tpu.matmul %245, %232, %cst_104 {dimension_numbers = #tpu.dot_dimension_numbers<[1], [0], [0], [1], [0, 0, 1, 1], [], []>} : vector<8x8xf32>, vector<8x16xf32>, vector<8x16xf32> -> vector<8x16xf32>
    %247 = vector.extract_strided_slice %207 {offsets = [16, 0], sizes = [16, 32], strides = [1, 1]} : vector<32x32xf32> to vector<16x32xf32>
    %cst_105 = arith.constant dense<0.000000e+00> : vector<8x32xf32>
    %248 = tpu.matmul %246, %247, %cst_105 {dimension_numbers = #tpu.dot_dimension_numbers<[1], [0], [0], [1], [0, 0, 1, 1], [], []>} : vector<8x16xf32>, vector<16x32xf32>, vector<8x32xf32> -> vector<8x32xf32>
    %249 = arith.addf %229, %248 : vector<8x32xf32>
    %250 = vector.extract_strided_slice %1 {offsets = [1, 0], sizes = [1, 8], strides = [1, 1]} : vector<2x8xf32> to vector<1x8xf32>
    %cst_106 = arith.constant 0.000000e+00 : f32
    %251 = vector.broadcast %cst_106 : f32 to vector<8x32xf32>
    %252 = vector.extract_strided_slice %205 {offsets = [8, 0], sizes = [8, 16], strides = [1, 1]} : vector<16x96xf32> to vector<8x16xf32>
    %253 = vector.extract_strided_slice %205 {offsets = [8, 32], sizes = [8, 16], strides = [1, 1]} : vector<16x96xf32> to vector<8x16xf32>
    %254 = vector.extract_strided_slice %205 {offsets = [8, 64], sizes = [8, 16], strides = [1, 1]} : vector<16x96xf32> to vector<8x16xf32>
    %cst_107 = arith.constant dense<0.000000e+00> : vector<8x8xf32>
    %255 = tpu.matmul %252, %253, %cst_107 {dimension_numbers = #tpu.dot_dimension_numbers<[1], [1], [0], [0], [0, 0, 1, 0], [], []>} : vector<8x16xf32>, vector<8x16xf32>, vector<8x8xf32> -> vector<8x8xf32>
    %256 = vector.broadcast %250 : vector<1x8xf32> to vector<8x8xf32>
    %257 = arith.addf %255, %256 : vector<8x8xf32>
    %cst_108 = arith.constant dense<0xFF800000> : vector<8xf32>
    %258 = vector.multi_reduction <maximumf>, %257, %cst_108 [1] : vector<8x8xf32> to vector<8xf32>
    %259 = vector.shape_cast %258 : vector<8xf32> to vector<8x1xf32>
    %260 = vector.broadcast %259 : vector<8x1xf32> to vector<8x8xf32>
    %261 = arith.subf %257, %260 : vector<8x8xf32>
    %262 = math.exp %261 : vector<8x8xf32>
    %cst_109 = arith.constant dense<0.000000e+00> : vector<8xf32>
    %263 = vector.multi_reduction <add>, %262, %cst_109 [1] : vector<8x8xf32> to vector<8xf32>
    %264 = vector.shape_cast %263 : vector<8xf32> to vector<8x1xf32>
    %265 = tpu.reciprocal %264 {approx = true} : vector<8x1xf32> -> vector<8x1xf32>
    %266 = vector.broadcast %265 : vector<8x1xf32> to vector<8x8xf32>
    %267 = arith.mulf %262, %266 : vector<8x8xf32>
    %cst_110 = arith.constant dense<0.000000e+00> : vector<8x16xf32>
    %268 = tpu.matmul %267, %254, %cst_110 {dimension_numbers = #tpu.dot_dimension_numbers<[1], [0], [0], [1], [0, 0, 1, 1], [], []>} : vector<8x8xf32>, vector<8x16xf32>, vector<8x16xf32> -> vector<8x16xf32>
    %269 = vector.extract_strided_slice %207 {offsets = [0, 0], sizes = [16, 32], strides = [1, 1]} : vector<32x32xf32> to vector<16x32xf32>
    %cst_111 = arith.constant dense<0.000000e+00> : vector<8x32xf32>
    %270 = tpu.matmul %268, %269, %cst_111 {dimension_numbers = #tpu.dot_dimension_numbers<[1], [0], [0], [1], [0, 0, 1, 1], [], []>} : vector<8x16xf32>, vector<16x32xf32>, vector<8x32xf32> -> vector<8x32xf32>
    %271 = arith.addf %251, %270 : vector<8x32xf32>
    %272 = vector.extract_strided_slice %205 {offsets = [8, 16], sizes = [8, 16], strides = [1, 1]} : vector<16x96xf32> to vector<8x16xf32>
    %273 = vector.extract_strided_slice %205 {offsets = [8, 48], sizes = [8, 16], strides = [1, 1]} : vector<16x96xf32> to vector<8x16xf32>
    %274 = vector.extract_strided_slice %205 {offsets = [8, 80], sizes = [8, 16], strides = [1, 1]} : vector<16x96xf32> to vector<8x16xf32>
    %cst_112 = arith.constant dense<0.000000e+00> : vector<8x8xf32>
    %275 = tpu.matmul %272, %273, %cst_112 {dimension_numbers = #tpu.dot_dimension_numbers<[1], [1], [0], [0], [0, 0, 1, 0], [], []>} : vector<8x16xf32>, vector<8x16xf32>, vector<8x8xf32> -> vector<8x8xf32>
    %276 = vector.broadcast %250 : vector<1x8xf32> to vector<8x8xf32>
    %277 = arith.addf %275, %276 : vector<8x8xf32>
    %cst_113 = arith.constant dense<0xFF800000> : vector<8xf32>
    %278 = vector.multi_reduction <maximumf>, %277, %cst_113 [1] : vector<8x8xf32> to vector<8xf32>
    %279 = vector.shape_cast %278 : vector<8xf32> to vector<8x1xf32>
    %280 = vector.broadcast %279 : vector<8x1xf32> to vector<8x8xf32>
    %281 = arith.subf %277, %280 : vector<8x8xf32>
    %282 = math.exp %281 : vector<8x8xf32>
    %cst_114 = arith.constant dense<0.000000e+00> : vector<8xf32>
    %283 = vector.multi_reduction <add>, %282, %cst_114 [1] : vector<8x8xf32> to vector<8xf32>
    %284 = vector.shape_cast %283 : vector<8xf32> to vector<8x1xf32>
    %285 = tpu.reciprocal %284 {approx = true} : vector<8x1xf32> -> vector<8x1xf32>
    %286 = vector.broadcast %285 : vector<8x1xf32> to vector<8x8xf32>
    %287 = arith.mulf %282, %286 : vector<8x8xf32>
    %cst_115 = arith.constant dense<0.000000e+00> : vector<8x16xf32>
    %288 = tpu.matmul %287, %274, %cst_115 {dimension_numbers = #tpu.dot_dimension_numbers<[1], [0], [0], [1], [0, 0, 1, 1], [], []>} : vector<8x8xf32>, vector<8x16xf32>, vector<8x16xf32> -> vector<8x16xf32>
    %289 = vector.extract_strided_slice %207 {offsets = [16, 0], sizes = [16, 32], strides = [1, 1]} : vector<32x32xf32> to vector<16x32xf32>
    %cst_116 = arith.constant dense<0.000000e+00> : vector<8x32xf32>
    %290 = tpu.matmul %288, %289, %cst_116 {dimension_numbers = #tpu.dot_dimension_numbers<[1], [0], [0], [1], [0, 0, 1, 1], [], []>} : vector<8x16xf32>, vector<16x32xf32>, vector<8x32xf32> -> vector<8x32xf32>
    %291 = arith.addf %271, %290 : vector<8x32xf32>
    %292 = tpu.concatenate %249, %291 in 0 : vector<8x32xf32>, vector<8x32xf32> -> vector<16x32xf32>
    %c1_117 = arith.constant 1 : index
    %c0_118 = arith.constant 0 : index
    %c0_119 = arith.constant 0 : index
    %293 = vector.load %arg8[%c1_117, %c0_118, %c0_119] : memref<2x1x32xf32, #tpu.memory_space<vmem>>, vector<1x1x32xf32>
    %294 = vector.shape_cast %293 : vector<1x1x32xf32> to vector<1x32xf32>
    %295 = vector.broadcast %294 : vector<1x32xf32> to vector<16x32xf32>
    %296 = arith.addf %292, %295 : vector<16x32xf32>
    %297 = arith.addf %296, %198 : vector<16x32xf32>
    %c1_120 = arith.constant 1 : index
    %c0_121 = arith.constant 0 : index
    %c0_122 = arith.constant 0 : index
    %298 = vector.load %arg9[%c1_120, %c0_121, %c0_122] : memref<2x1x32xf32, #tpu.memory_space<vmem>>, vector<1x1x32xf32>
    %299 = vector.shape_cast %298 : vector<1x1x32xf32> to vector<1x32xf32>
    %c1_123 = arith.constant 1 : index
    %c0_124 = arith.constant 0 : index
    %c0_125 = arith.constant 0 : index
    %300 = vector.load %arg10[%c1_123, %c0_124, %c0_125] : memref<2x1x32xf32, #tpu.memory_space<vmem>>, vector<1x1x32xf32>
    %301 = vector.shape_cast %300 : vector<1x1x32xf32> to vector<1x32xf32>
    %cst_126 = arith.constant dense<0.000000e+00> : vector<16xf32>
    %302 = vector.multi_reduction <add>, %297, %cst_126 [1] : vector<16x32xf32> to vector<16xf32>
    %303 = vector.shape_cast %302 : vector<16xf32> to vector<16x1xf32>
    %cst_127 = arith.constant 3.200000e+01 : f32
    %304 = vector.broadcast %cst_127 : f32 to vector<16x1xf32>
    %305 = arith.divf %303, %304 : vector<16x1xf32>
    %306 = vector.broadcast %305 : vector<16x1xf32> to vector<16x32xf32>
    %307 = arith.subf %297, %306 : vector<16x32xf32>
    %308 = arith.mulf %307, %307 : vector<16x32xf32>
    %cst_128 = arith.constant dense<0.000000e+00> : vector<16xf32>
    %309 = vector.multi_reduction <add>, %308, %cst_128 [1] : vector<16x32xf32> to vector<16xf32>
    %310 = vector.shape_cast %309 : vector<16xf32> to vector<16x1xf32>
    %cst_129 = arith.constant 3.200000e+01 : f32
    %311 = vector.broadcast %cst_129 : f32 to vector<16x1xf32>
    %312 = arith.divf %310, %311 : vector<16x1xf32>
    %cst_130 = arith.constant 9.99999996E-13 : f32
    %313 = vector.broadcast %cst_130 : f32 to vector<16x1xf32>
    %314 = arith.addf %312, %313 : vector<16x1xf32>
    %315 = math.rsqrt %314 : vector<16x1xf32>
    %316 = vector.broadcast %315 : vector<16x1xf32> to vector<16x32xf32>
    %317 = arith.mulf %307, %316 : vector<16x32xf32>
    %318 = vector.broadcast %299 : vector<1x32xf32> to vector<16x32xf32>
    %319 = arith.mulf %317, %318 : vector<16x32xf32>
    %320 = vector.broadcast %301 : vector<1x32xf32> to vector<16x32xf32>
    %321 = arith.addf %319, %320 : vector<16x32xf32>
    %c1_131 = arith.constant 1 : index
    %c0_132 = arith.constant 0 : index
    %c0_133 = arith.constant 0 : index
    %322 = vector.load %arg11[%c1_131, %c0_132, %c0_133] : memref<2x32x64xf32, #tpu.memory_space<vmem>>, vector<1x32x64xf32>
    %323 = vector.shape_cast %322 : vector<1x32x64xf32> to vector<32x64xf32>
    %cst_134 = arith.constant dense<0.000000e+00> : vector<16x64xf32>
    %324 = tpu.matmul %321, %323, %cst_134 {dimension_numbers = #tpu.dot_dimension_numbers<[1], [0], [0], [1], [0, 0, 1, 1], [], []>} : vector<16x32xf32>, vector<32x64xf32>, vector<16x64xf32> -> vector<16x64xf32>
    %c1_135 = arith.constant 1 : index
    %c0_136 = arith.constant 0 : index
    %c0_137 = arith.constant 0 : index
    %325 = vector.load %arg12[%c1_135, %c0_136, %c0_137] : memref<2x1x64xf32, #tpu.memory_space<vmem>>, vector<1x1x64xf32>
    %326 = vector.shape_cast %325 : vector<1x1x64xf32> to vector<1x64xf32>
    %327 = vector.broadcast %326 : vector<1x64xf32> to vector<16x64xf32>
    %328 = arith.addf %324, %327 : vector<16x64xf32>
    %cst_138 = arith.constant 5.000000e-01 : f32
    %329 = vector.broadcast %cst_138 : f32 to vector<16x64xf32>
    %330 = arith.mulf %329, %328 : vector<16x64xf32>
    %cst_139 = arith.constant 4.471500e-02 : f32
    %331 = vector.broadcast %cst_139 : f32 to vector<16x64xf32>
    %332 = arith.mulf %331, %328 : vector<16x64xf32>
    %333 = arith.mulf %332, %328 : vector<16x64xf32>
    %334 = arith.mulf %333, %328 : vector<16x64xf32>
    %335 = arith.addf %328, %334 : vector<16x64xf32>
    %cst_140 = arith.constant 0.797884583 : f32
    %336 = vector.broadcast %cst_140 : f32 to vector<16x64xf32>
    %337 = arith.mulf %336, %335 : vector<16x64xf32>
    %338 = math.tanh %337 : vector<16x64xf32>
    %cst_141 = arith.constant 1.000000e+00 : f32
    %339 = vector.broadcast %cst_141 : f32 to vector<16x64xf32>
    %340 = arith.addf %339, %338 : vector<16x64xf32>
    %341 = arith.mulf %330, %340 : vector<16x64xf32>
    %c1_142 = arith.constant 1 : index
    %c0_143 = arith.constant 0 : index
    %c0_144 = arith.constant 0 : index
    %342 = vector.load %arg13[%c1_142, %c0_143, %c0_144] : memref<2x64x32xf32, #tpu.memory_space<vmem>>, vector<1x64x32xf32>
    %343 = vector.shape_cast %342 : vector<1x64x32xf32> to vector<64x32xf32>
    %cst_145 = arith.constant dense<0.000000e+00> : vector<16x32xf32>
    %344 = tpu.matmul %341, %343, %cst_145 {dimension_numbers = #tpu.dot_dimension_numbers<[1], [0], [0], [1], [0, 0, 1, 1], [], []>} : vector<16x64xf32>, vector<64x32xf32>, vector<16x32xf32> -> vector<16x32xf32>
    %c1_146 = arith.constant 1 : index
    %c0_147 = arith.constant 0 : index
    %c0_148 = arith.constant 0 : index
    %345 = vector.load %arg14[%c1_146, %c0_147, %c0_148] : memref<2x1x32xf32, #tpu.memory_space<vmem>>, vector<1x1x32xf32>
    %346 = vector.shape_cast %345 : vector<1x1x32xf32> to vector<1x32xf32>
    %347 = vector.broadcast %346 : vector<1x32xf32> to vector<16x32xf32>
    %348 = arith.addf %344, %347 : vector<16x32xf32>
    %349 = arith.addf %348, %321 : vector<16x32xf32>
    %c1_149 = arith.constant 1 : index
    %c0_150 = arith.constant 0 : index
    %c0_151 = arith.constant 0 : index
    %350 = vector.load %arg15[%c1_149, %c0_150, %c0_151] : memref<2x1x32xf32, #tpu.memory_space<vmem>>, vector<1x1x32xf32>
    %351 = vector.shape_cast %350 : vector<1x1x32xf32> to vector<1x32xf32>
    %c1_152 = arith.constant 1 : index
    %c0_153 = arith.constant 0 : index
    %c0_154 = arith.constant 0 : index
    %352 = vector.load %arg16[%c1_152, %c0_153, %c0_154] : memref<2x1x32xf32, #tpu.memory_space<vmem>>, vector<1x1x32xf32>
    %353 = vector.shape_cast %352 : vector<1x1x32xf32> to vector<1x32xf32>
    %cst_155 = arith.constant dense<0.000000e+00> : vector<16xf32>
    %354 = vector.multi_reduction <add>, %349, %cst_155 [1] : vector<16x32xf32> to vector<16xf32>
    %355 = vector.shape_cast %354 : vector<16xf32> to vector<16x1xf32>
    %cst_156 = arith.constant 3.200000e+01 : f32
    %356 = vector.broadcast %cst_156 : f32 to vector<16x1xf32>
    %357 = arith.divf %355, %356 : vector<16x1xf32>
    %358 = vector.broadcast %357 : vector<16x1xf32> to vector<16x32xf32>
    %359 = arith.subf %349, %358 : vector<16x32xf32>
    %360 = arith.mulf %359, %359 : vector<16x32xf32>
    %cst_157 = arith.constant dense<0.000000e+00> : vector<16xf32>
    %361 = vector.multi_reduction <add>, %360, %cst_157 [1] : vector<16x32xf32> to vector<16xf32>
    %362 = vector.shape_cast %361 : vector<16xf32> to vector<16x1xf32>
    %cst_158 = arith.constant 3.200000e+01 : f32
    %363 = vector.broadcast %cst_158 : f32 to vector<16x1xf32>
    %364 = arith.divf %362, %363 : vector<16x1xf32>
    %cst_159 = arith.constant 9.99999996E-13 : f32
    %365 = vector.broadcast %cst_159 : f32 to vector<16x1xf32>
    %366 = arith.addf %364, %365 : vector<16x1xf32>
    %367 = math.rsqrt %366 : vector<16x1xf32>
    %368 = vector.broadcast %367 : vector<16x1xf32> to vector<16x32xf32>
    %369 = arith.mulf %359, %368 : vector<16x32xf32>
    %370 = vector.broadcast %351 : vector<1x32xf32> to vector<16x32xf32>
    %371 = arith.mulf %369, %370 : vector<16x32xf32>
    %372 = vector.broadcast %353 : vector<1x32xf32> to vector<16x32xf32>
    %373 = arith.addf %371, %372 : vector<16x32xf32>
    %374 = vector.extract_strided_slice %373 {offsets = [0, 0], sizes = [1, 32], strides = [1, 1]} : vector<16x32xf32> to vector<1x32xf32>
    %375 = vector.extract_strided_slice %373 {offsets = [8, 0], sizes = [1, 32], strides = [1, 1]} : vector<16x32xf32> to vector<1x32xf32>
    %376 = tpu.concatenate %374, %375 in 0 : vector<1x32xf32>, vector<1x32xf32> -> vector<2x32xf32>
    %c0_160 = arith.constant 0 : index
    %c0_161 = arith.constant 0 : index
    %377 = vector.load %arg17[%c0_160, %c0_161] : memref<32x32xf32, #tpu.memory_space<vmem>>, vector<32x32xf32>
    %cst_162 = arith.constant dense<0.000000e+00> : vector<2x32xf32>
    %378 = tpu.matmul %376, %377, %cst_162 {dimension_numbers = #tpu.dot_dimension_numbers<[1], [0], [0], [1], [0, 0, 1, 1], [], []>} : vector<2x32xf32>, vector<32x32xf32>, vector<2x32xf32> -> vector<2x32xf32>
    %c0_163 = arith.constant 0 : index
    %c0_164 = arith.constant 0 : index
    %379 = vector.load %arg18[%c0_163, %c0_164] : memref<1x32xf32, #tpu.memory_space<vmem>>, vector<1x32xf32>
    %380 = vector.broadcast %379 : vector<1x32xf32> to vector<2x32xf32>
    %381 = arith.addf %378, %380 : vector<2x32xf32>
    %382 = math.tanh %381 : vector<2x32xf32>
    %c0_165 = arith.constant 0 : index
    %c0_166 = arith.constant 0 : index
    %383 = vector.load %arg19[%c0_165, %c0_166] : memref<32x128xf32, #tpu.memory_space<vmem>>, vector<32x128xf32>
    %cst_167 = arith.constant dense<0.000000e+00> : vector<2x128xf32>
    %384 = tpu.matmul %382, %383, %cst_167 {dimension_numbers = #tpu.dot_dimension_numbers<[1], [0], [0], [1], [0, 0, 1, 1], [], []>} : vector<2x32xf32>, vector<32x128xf32>, vector<2x128xf32> -> vector<2x128xf32>
    %c0_168 = arith.constant 0 : index
    %c0_169 = arith.constant 0 : index
    %385 = vector.load %arg20[%c0_168, %c0_169] : memref<1x128xf32, #tpu.memory_space<vmem>>, vector<1x128xf32>
    %386 = vector.broadcast %385 : vector<1x128xf32> to vector<2x128xf32>
    %387 = arith.addf %384, %386 : vector<2x128xf32>
    %c0_170 = arith.constant 0 : index
    %c0_171 = arith.constant 0 : index
    %388 = vector.load %arg21[%c0_170, %c0_171] : memref<2x128xf32, #tpu.memory_space<vmem>>, vector<2x128xf32>
    tpu.vector_store %arg21[%c0_170, %c0_171], %387 {strides = array<i32>} : memref<2x128xf32, #tpu.memory_space<vmem>>, vector<2x128xf32>,
    return
  }
  func.func @transform_0(%arg0: i32) -> (i32, i32) {
    %c0_i32 = arith.constant 0 : i32
    %c0_i32_0 = arith.constant 0 : i32
    %c0_i32_1 = arith.constant 0 : i32
    return %c0_i32, %c0_i32_0 : i32, i32
  }
  func.func @transform_1(%arg0: i32) -> (i32, i32) {
    %c0_i32 = arith.constant 0 : i32
    %c0_i32_0 = arith.constant 0 : i32
    %c0_i32_1 = arith.constant 0 : i32
    return %c0_i32, %c0_i32_0 : i32, i32
  }
  func.func @transform_2(%arg0: i32) -> (i32, i32) {
    %c0_i32 = arith.constant 0 : i32
    %c0_i32_0 = arith.constant 0 : i32
    %c0_i32_1 = arith.constant 0 : i32
    return %c0_i32, %c0_i32_0 : i32, i32
  }
  func.func @transform_3(%arg0: i32) -> (i32, i32) {
    %c0_i32 = arith.constant 0 : i32
    %c0_i32_0 = arith.constant 0 : i32
    %c0_i32_1 = arith.constant 0 : i32
    return %c0_i32, %c0_i32_0 : i32, i32
  }
  func.func @transform_4(%arg0: i32) -> (i32, i32, i32) {
    %c0_i32 = arith.constant 0 : i32
    %c0_i32_0 = arith.constant 0 : i32
    %c0_i32_1 = arith.constant 0 : i32
    %c0_i32_2 = arith.constant 0 : i32
    return %c0_i32, %c0_i32_0, %c0_i32_1 : i32, i32, i32
  }
  func.func @transform_5(%arg0: i32) -> (i32, i32, i32) {
    %c0_i32 = arith.constant 0 : i32
    %c0_i32_0 = arith.constant 0 : i32
    %c0_i32_1 = arith.constant 0 : i32
    %c0_i32_2 = arith.constant 0 : i32
    return %c0_i32, %c0_i32_0, %c0_i32_1 : i32, i32, i32
  }
  func.func @transform_6(%arg0: i32) -> (i32, i32, i32) {
    %c0_i32 = arith.constant 0 : i32
    %c0_i32_0 = arith.constant 0 : i32
    %c0_i32_1 = arith.constant 0 : i32
    %c0_i32_2 = arith.constant 0 : i32
    return %c0_i32, %c0_i32_0, %c0_i32_1 : i32, i32, i32
  }
  func.func @transform_7(%arg0: i32) -> (i32, i32, i32) {
    %c0_i32 = arith.constant 0 : i32
    %c0_i32_0 = arith.constant 0 : i32
    %c0_i32_1 = arith.constant 0 : i32
    %c0_i32_2 = arith.constant 0 : i32
    return %c0_i32, %c0_i32_0, %c0_i32_1 : i32, i32, i32
  }
  func.func @transform_8(%arg0: i32) -> (i32, i32, i32) {
    %c0_i32 = arith.constant 0 : i32
    %c0_i32_0 = arith.constant 0 : i32
    %c0_i32_1 = arith.constant 0 : i32
    %c0_i32_2 = arith.constant 0 : i32
    return %c0_i32, %c0_i32_0, %c0_i32_1 : i32, i32, i32
  }
  func.func @transform_9(%arg0: i32) -> (i32, i32, i32) {
    %c0_i32 = arith.constant 0 : i32
    %c0_i32_0 = arith.constant 0 : i32
    %c0_i32_1 = arith.constant 0 : i32
    %c0_i32_2 = arith.constant 0 : i32
    return %c0_i32, %c0_i32_0, %c0_i32_1 : i32, i32, i32
  }
  func.func @transform_10(%arg0: i32) -> (i32, i32, i32) {
    %c0_i32 = arith.constant 0 : i32
    %c0_i32_0 = arith.constant 0 : i32
    %c0_i32_1 = arith.constant 0 : i32
    %c0_i32_2 = arith.constant 0 : i32
    return %c0_i32, %c0_i32_0, %c0_i32_1 : i32, i32, i32
  }
  func.func @transform_11(%arg0: i32) -> (i32, i32, i32) {
    %c0_i32 = arith.constant 0 : i32
    %c0_i32_0 = arith.constant 0 : i32
    %c0_i32_1 = arith.constant 0 : i32
    %c0_i32_2 = arith.constant 0 : i32
    return %c0_i32, %c0_i32_0, %c0_i32_1 : i32, i32, i32
  }
  func.func @transform_12(%arg0: i32) -> (i32, i32, i32) {
    %c0_i32 = arith.constant 0 : i32
    %c0_i32_0 = arith.constant 0 : i32
    %c0_i32_1 = arith.constant 0 : i32
    %c0_i32_2 = arith.constant 0 : i32
    return %c0_i32, %c0_i32_0, %c0_i32_1 : i32, i32, i32
  }
  func.func @transform_13(%arg0: i32) -> (i32, i32, i32) {
    %c0_i32 = arith.constant 0 : i32
    %c0_i32_0 = arith.constant 0 : i32
    %c0_i32_1 = arith.constant 0 : i32
    %c0_i32_2 = arith.constant 0 : i32
    return %c0_i32, %c0_i32_0, %c0_i32_1 : i32, i32, i32
  }
  func.func @transform_14(%arg0: i32) -> (i32, i32, i32) {
    %c0_i32 = arith.constant 0 : i32
    %c0_i32_0 = arith.constant 0 : i32
    %c0_i32_1 = arith.constant 0 : i32
    %c0_i32_2 = arith.constant 0 : i32
    return %c0_i32, %c0_i32_0, %c0_i32_1 : i32, i32, i32
  }
  func.func @transform_15(%arg0: i32) -> (i32, i32, i32) {
    %c0_i32 = arith.constant 0 : i32
    %c0_i32_0 = arith.constant 0 : i32
    %c0_i32_1 = arith.constant 0 : i32
    %c0_i32_2 = arith.constant 0 : i32
    return %c0_i32, %c0_i32_0, %c0_i32_1 : i32, i32, i32
  }
  func.func @transform_16(%arg0: i32) -> (i32, i32) {
    %c0_i32 = arith.constant 0 : i32
    %c0_i32_0 = arith.constant 0 : i32
    %c0_i32_1 = arith.constant 0 : i32
    return %c0_i32, %c0_i32_0 : i32, i32
  }
  func.func @transform_17(%arg0: i32) -> (i32, i32) {
    %c0_i32 = arith.constant 0 : i32
    %c0_i32_0 = arith.constant 0 : i32
    %c0_i32_1 = arith.constant 0 : i32
    return %c0_i32, %c0_i32_0 : i32, i32
  }
  func.func @transform_18(%arg0: i32) -> (i32, i32) {
    %c0_i32 = arith.constant 0 : i32
    %c0_i32_0 = arith.constant 0 : i32
    %c0_i32_1 = arith.constant 0 : i32
    return %c0_i32, %c0_i32_0 : i32, i32
  }
  func.func @transform_19(%arg0: i32) -> (i32, i32) {
    %c0_i32 = arith.constant 0 : i32
    %c0_i32_0 = arith.constant 0 : i32
    %c0_i32_1 = arith.constant 0 : i32
    return %c0_i32, %c0_i32_0 : i32, i32
  }
  func.func @transform_20(%arg0: i32) -> (i32, i32) {
    %c0_i32 = arith.constant 0 : i32
    %c0_i32_0 = arith.constant 0 : i32
    %c0_i32_1 = arith.constant 0 : i32
    return %c0_i32, %c0_i32_0 : i32, i32
  }
}

</mosaic_0001>

<llo_original>
// kernel: bert_base_uncased_forward.1
$region0: #{bert_base_uncased_forward.1}
  #allocation0 [shape = 'u32[]', space=smem, size = 0x4, offset = 0x4, fixed_abs, tag = 'smem constant byte address 0x4 - core index']
  #allocation1 [shape = 'u32[72,128]{1,0:T(1,128)}', space=vmem, size = 0x9000, scoped, tag = 'internal scratch']
  %s0 = inlined_call_operand.vmem [shape: f32[16,32], index: 0, kind: input, shape index: {}]
  %s1 = inlined_call_operand.vmem [shape: f32[2,8], index: 1, kind: input, shape index: {}]
  %s2 = inlined_call_operand.vmem [shape: f32[1,32], index: 2, kind: input, shape index: {}]
  %s3 = inlined_call_operand.vmem [shape: f32[1,32], index: 3, kind: input, shape index: {}]
  %s4 = inlined_call_operand.vmem [shape: f32[2,32,96], index: 4, kind: input, shape index: {}]
  %s5 = inlined_call_operand.vmem [shape: f32[2,1,96], index: 5, kind: input, shape index: {}]
  %s6 = inlined_call_operand.vmem [shape: f32[2,32,32], index: 6, kind: input, shape index: {}]
  %s7 = inlined_call_operand.vmem [shape: f32[2,1,32], index: 7, kind: input, shape index: {}]
  %s8 = inlined_call_operand.vmem [shape: f32[2,1,32], index: 8, kind: input, shape index: {}]
  %s9 = inlined_call_operand.vmem [shape: f32[2,1,32], index: 9, kind: input, shape index: {}]
  %s10 = inlined_call_operand.vmem [shape: f32[2,32,64], index: 10, kind: input, shape index: {}]
  %s11 = inlined_call_operand.vmem [shape: f32[2,1,64], index: 11, kind: input, shape index: {}]
  %s12 = inlined_call_operand.vmem [shape: f32[2,64,32], index: 12, kind: input, shape index: {}]
  %s13 = inlined_call_operand.vmem [shape: f32[2,1,32], index: 13, kind: input, shape index: {}]
  %s14 = inlined_call_operand.vmem [shape: f32[2,1,32], index: 14, kind: input, shape index: {}]
  %s15 = inlined_call_operand.vmem [shape: f32[2,1,32], index: 15, kind: input, shape index: {}]
  %s16 = inlined_call_operand.vmem [shape: f32[32,32], index: 16, kind: input, shape index: {}]
  %s17 = inlined_call_operand.vmem [shape: f32[1,32], index: 17, kind: input, shape index: {}]
  %s18 = inlined_call_operand.vmem [shape: f32[32,128], index: 18, kind: input, shape index: {}]
  %s19 = inlined_call_operand.vmem [shape: f32[1,128], index: 19, kind: input, shape index: {}]
  %s20 = inlined_call_operand.hbm [shape: f32[2,128], index: 20, kind: output, shape index: {}]
  %s21 = sld [smem:[#allocation0]]
  $region90: #{bert_base_uncased_forward.1} parent=0
    _
  %s23 = ssub.s32 1, %s21
  %s24 = scalar_select 0, %s23, %s21
  $region1: #{bert_base_uncased_forward.1} parent=0
    #allocation2 [shape = 'u8[1024]{0}', space=vmem, size = 0x400, scoped, tag = 'output window, operand 0, single buffered']
    #allocation3 [shape = 's32[1]{0}', space=sflag, size = 0x4, scoped, tag = 'scoped memory for bert_base_uncased_forward.1']
    %25 = vsyncpa [#allocation3], 0
    // Predicated region
    $region2: #{bert_base_uncased_forward.1} parent=1 // pred_check
      _
    $region3: #{bert_base_uncased_forward.1} parent=1 // pred_check_branch
      %27 = sbr.rel (0) target = $region5
    $region4: #{bert_base_uncased_forward.1} parent=1 // pred_region
      _
    $region5: #{bert_base_uncased_forward.1} parent=1 // pred_fallthru
      _
    // Predicated region
    $region6: #{bert_base_uncased_forward.1} parent=1 // pred_check
      _
    $region7: #{bert_base_uncased_forward.1} parent=1 // pred_check_branch
      %29 = sbr.rel (0) target = $region9
    $region8: #{bert_base_uncased_forward.1} parent=1 // pred_region
      _
    $region9: #{bert_base_uncased_forward.1} parent=1 // pred_fallthru
      _
    // Predicated region
    $region10: #{bert_base_uncased_forward.1} parent=1 // pred_check
      _
    $region11: #{bert_base_uncased_forward.1} parent=1 // pred_check_branch
      %31 = sbr.rel (0) target = $region13
    $region12: #{bert_base_uncased_forward.1} parent=1 // pred_region
      _
    $region13: #{bert_base_uncased_forward.1} parent=1 // pred_fallthru
      _
    // Predicated region
    $region14: #{bert_base_uncased_forward.1} parent=1 // pred_check
      _
    $region15: #{bert_base_uncased_forward.1} parent=1 // pred_check_branch
      %33 = sbr.rel (0) target = $region17
    $region16: #{bert_base_uncased_forward.1} parent=1 // pred_region
      _
    $region17: #{bert_base_uncased_forward.1} parent=1 // pred_fallthru
      _
    // Predicated region
    $region18: #{bert_base_uncased_forward.1} parent=1 // pred_check
      _
    $region19: #{bert_base_uncased_forward.1} parent=1 // pred_check_branch
      %35 = sbr.rel (0) target = $region21
    $region20: #{bert_base_uncased_forward.1} parent=1 // pred_region
      _
    $region21: #{bert_base_uncased_forward.1} parent=1 // pred_fallthru
      _
    // Predicated region
    $region22: #{bert_base_uncased_forward.1} parent=1 // pred_check
      _
    $region23: #{bert_base_uncased_forward.1} parent=1 // pred_check_branch
      %37 = sbr.rel (0) target = $region25
    $region24: #{bert_base_uncased_forward.1} parent=1 // pred_region
      _
    $region25: #{bert_base_uncased_forward.1} parent=1 // pred_fallthru
      _
    // Predicated region
    $region26: #{bert_base_uncased_forward.1} parent=1 // pred_check
      _
    $region27: #{bert_base_uncased_forward.1} parent=1 // pred_check_branch
      %39 = sbr.rel (0) target = $region29
    $region28: #{bert_base_uncased_forward.1} parent=1 // pred_region
      _
    $region29: #{bert_base_uncased_forward.1} parent=1 // pred_fallthru
      _
    // Predicated region
    $region30: #{bert_base_uncased_forward.1} parent=1 // pred_check
      _
    $region31: #{bert_base_uncased_forward.1} parent=1 // pred_check_branch
      %41 = sbr.rel (0) target = $region33
    $region32: #{bert_base_uncased_forward.1} parent=1 // pred_region
      _
    $region33: #{bert_base_uncased_forward.1} parent=1 // pred_fallthru
      _
    // Predicated region
    $region34: #{bert_base_uncased_forward.1} parent=1 // pred_check
      _
    $region35: #{bert_base_uncased_forward.1} parent=1 // pred_check_branch
      %43 = sbr.rel (0) target = $region37
    $region36: #{bert_base_uncased_forward.1} parent=1 // pred_region
      _
    $region37: #{bert_base_uncased_forward.1} parent=1 // pred_fallthru
      _
    // Predicated region
    $region38: #{bert_base_uncased_forward.1} parent=1 // pred_check
      _
    $region39: #{bert_base_uncased_forward.1} parent=1 // pred_check_branch
      %45 = sbr.rel (0) target = $region41
    $region40: #{bert_base_uncased_forward.1} parent=1 // pred_region
      _
    $region41: #{bert_base_uncased_forward.1} parent=1 // pred_fallthru
      _
    // Predicated region
    $region42: #{bert_base_uncased_forward.1} parent=1 // pred_check
      _
    $region43: #{bert_base_uncased_forward.1} parent=1 // pred_check_branch
      %47 = sbr.rel (0) target = $region45
    $region44: #{bert_base_uncased_forward.1} parent=1 // pred_region
      _
    $region45: #{bert_base_uncased_forward.1} parent=1 // pred_fallthru
      _
    // Predicated region
    $region46: #{bert_base_uncased_forward.1} parent=1 // pred_check
      _
    $region47: #{bert_base_uncased_forward.1} parent=1 // pred_check_branch
      %49 = sbr.rel (0) target = $region49
    $region48: #{bert_base_uncased_forward.1} parent=1 // pred_region
      _
    $region49: #{bert_base_uncased_forward.1} parent=1 // pred_fallthru
      _
    // Predicated region
    $region50: #{bert_base_uncased_forward.1} parent=1 // pred_check
      _
    $region51: #{bert_base_uncased_forward.1} parent=1 // pred_check_branch
      %51 = sbr.rel (0) target = $region53
    $region52: #{bert_base_uncased_forward.1} parent=1 // pred_region
      _
    $region53: #{bert_base_uncased_forward.1} parent=1 // pred_fallthru
      _
    // Predicated region
    $region54: #{bert_base_uncased_forward.1} parent=1 // pred_check
      _
    $region55: #{bert_base_uncased_forward.1} parent=1 // pred_check_branch
      %53 = sbr.rel (0) target = $region57
    $region56: #{bert_base_uncased_forward.1} parent=1 // pred_region
      _
    $region57: #{bert_base_uncased_forward.1} parent=1 // pred_fallthru
      _
    // Predicated region
    $region58: #{bert_base_uncased_forward.1} parent=1 // pred_check
      _
    $region59: #{bert_base_uncased_forward.1} parent=1 // pred_check_branch
      %55 = sbr.rel (0) target = $region61
    $region60: #{bert_base_uncased_forward.1} parent=1 // pred_region
      _
    $region61: #{bert_base_uncased_forward.1} parent=1 // pred_fallthru
      _
    // Predicated region
    $region62: #{bert_base_uncased_forward.1} parent=1 // pred_check
      _
    $region63: #{bert_base_uncased_forward.1} parent=1 // pred_check_branch
      %57 = sbr.rel (0) target = $region65
    $region64: #{bert_base_uncased_forward.1} parent=1 // pred_region
      _
    $region65: #{bert_base_uncased_forward.1} parent=1 // pred_fallthru
      _
    // Predicated region
    $region66: #{bert_base_uncased_forward.1} parent=1 // pred_check
      _
    $region67: #{bert_base_uncased_forward.1} parent=1 // pred_check_branch
      %59 = sbr.rel (0) target = $region69
    $region68: #{bert_base_uncased_forward.1} parent=1 // pred_region
      _
    $region69: #{bert_base_uncased_forward.1} parent=1 // pred_fallthru
      _
    // Predicated region
    $region70: #{bert_base_uncased_forward.1} parent=1 // pred_check
      _
    $region71: #{bert_base_uncased_forward.1} parent=1 // pred_check_branch
      %61 = sbr.rel (0) target = $region73
    $region72: #{bert_base_uncased_forward.1} parent=1 // pred_region
      _
    $region73: #{bert_base_uncased_forward.1} parent=1 // pred_fallthru
      _
    // Predicated region
    $region74: #{bert_base_uncased_forward.1} parent=1 // pred_check
      _
    $region75: #{bert_base_uncased_forward.1} parent=1 // pred_check_branch
      %63 = sbr.rel (0) target = $region77
    $region76: #{bert_base_uncased_forward.1} parent=1 // pred_region
      _
    $region77: #{bert_base_uncased_forward.1} parent=1 // pred_fallthru
      _
    // Predicated region
    $region78: #{bert_base_uncased_forward.1} parent=1 // pred_check
      _
    $region79: #{bert_base_uncased_forward.1} parent=1 // pred_check_branch
      %65 = sbr.rel (0) target = $region81
    $region80: #{bert_base_uncased_forward.1} parent=1 // pred_region
      _
    $region81: #{bert_base_uncased_forward.1} parent=1 // pred_fallthru
      _
    %v66 = vld [vmem:[%s0] sm:$0xff]
    %v67 = vld [vmem:[%s0 + $0x8] sm:$0xff]
    %v68 = vld [vmem:[%s1] sm:$0x3]
    %v69 = vld [vmem:[%s2] sm:$0x1]
    %v70 = vld [vmem:[%s3] sm:$0x1]
    %vm71 = vcmask 261120
    %v72 = vsel %vm71, %v66, 0.0
    %73 = vadd.xlane.f32.xlu0 %v72
    %v74 = vpop.xlane.xlu0 %73
    %v75 = vsel %vm71, %v67, 0.0
    %76 = vadd.xlane.f32.xlu0 %v75
    %v77 = vpop.xlane.xlu0 %76
    %v78 = vrcp.pop 32.0
    %v79 = vmul.f32 32.0, %v78
    %v80 = vsub.f32 1.0, %v79
    %v81 = vmul.f32 %v78, %v80
    %v82 = vadd.f32 %v78, %v81
    %vm83 = vweird.f32 %v78
    %v84 = vsel %vm83, %v78, %v82
    %v85 = vmul.f32 %v74, %v84
    %v86 = vmul.f32 %v77, %v84
    %v87 = vsub.f32 %v66, %v85
    %v88 = vsub.f32 %v67, %v86
    %v89 = vmul.f32 %v87, %v87
    %v90 = vmul.f32 %v88, %v88
    %v91 = vsel %vm71, %v89, 0.0
    %92 = vadd.xlane.f32.xlu0 %v91
    %v93 = vpop.xlane.xlu0 %92
    %v94 = vsel %vm71, %v90, 0.0
    %95 = vadd.xlane.f32.xlu0 %v94
    %v96 = vpop.xlane.xlu0 %95
    %v97 = vmul.f32 %v93, %v84
    %v98 = vmul.f32 %v96, %v84
    %v99 = vadd.f32 %v97, 1e-12
    %v100 = vadd.f32 %v98, 1e-12
    %v101 = vrsqrt.pop %v99
    %v102 = vmul.f32 %v101, %v99
    %v103 = vmul.f32 %v102, %v101
    %v104 = vmul.f32 0.5, %v103
    %v105 = vsub.f32 1.5, %v104
    %v106 = vmul.f32 %v101, %v105
    %vm107 = vweird.f32 %v99
    %vm108 = vweird.f32 %v101
    %vm109 = vmor %vm107, %vm108
    %v110 = vsel %vm109, %v101, %v106
    %v111 = vrsqrt.pop %v100
    %v112 = vmul.f32 %v111, %v100
    %v113 = vmul.f32 %v112, %v111
    %v114 = vmul.f32 0.5, %v113
    %v115 = vsub.f32 1.5, %v114
    %v116 = vmul.f32 %v111, %v115
    %vm117 = vweird.f32 %v100
    %vm118 = vweird.f32 %v111
    %vm119 = vmor %vm117, %vm118
    %v120 = vsel %vm119, %v111, %v116
    %v121 = vmul.f32 %v87, %v110
    %v122 = vmul.f32 %v88, %v120
    %v124 = vperm.slane %v69, 0
    %v126 = vmul.f32 %v121, %v124
    %v127 = vmul.f32 %v122, %v124
    %v129 = vperm.slane %v70, 0
    %v131 = vadd.f32 %v126, %v129
    %v132 = vadd.f32 %v127, %v129
    %v133 = vld [vmem:[%s4] sm:$0xff]
    %v134 = vld [vmem:[%s4 + $0x8] sm:$0xff]
    %v135 = vld [vmem:[%s4 + $0x10] sm:$0xff]
    %v136 = vld [vmem:[%s4 + $0x18] sm:$0xff]
    %v137 = vld [vmem:[%s5] sm:$0x1]
    %v139 = vperm.slane %v137, 0
    %v142 = vsel %vm71, %v131, 0
    %v145 = vsel %vm71, %v132, 0
    %147 = vmatpush.msra.mxu0 0.0
    %148 = vmatpush.msra.mxu0 0.0
    %149 = vmatpush.msra.mxu0 0.0
    %150 = vmatpush.msra.mxu0 0.0
    %151 = vmatpush.msra.mxu0 0.0
    %152 = vmatpush.msra.mxu0 0.0
    %153 = vmatpush.msra.mxu0 0.0
    %154 = vmatpush.msra.mxu0 0.0
    %155 = vmatpush.msra.mxu0 0.0
    %156 = vmatpush.msra.mxu0 0.0
    %157 = vmatpush.msra.mxu0 0.0
    %158 = vmatpush.msra.mxu0 0.0
    %159 = vmatpush.msra.mxu0 %v136
    %160 = vmatpush.msra.mxu0 %v135
    %161 = vmatpush.msra.mxu0 %v134
    %162 = vmatpush.msra.mxu0 %v133
    %163 = vmatmul.f32.gmra.mxu0 %v142
    %v164 = vpop.f32.mrf.mxu0
    %v165 = vadd.f32 %v139, %v164
    %166 = vmatmul.f32.gmra.mxu0 %v145
    %v167 = vpop.f32.mrf.mxu0
    %v168 = vadd.f32 %v139, %v167
    %169 = vdwg.mxu0
    %v170 = vld [vmem:[%s6] sm:$0xff]
    %v171 = vld [vmem:[%s6 + $0x8] sm:$0xff]
    %v172 = vld [vmem:[%s6 + $0x10] sm:$0xff]
    %v173 = vld [vmem:[%s6 + $0x18] sm:$0xff]
    %v174 = vperm.slane %v68, 0
    %176 = vrot.lane.b32.xlu0 %v165, 96
    %v177 = vpop.permute.xlu0 %176
    %vm178 = vcmask 130048
    %v179 = vsel %vm178, %v165, 0
    %v181 = vsel %vm178, %v177, 0
    %183 = vmatpush.xpose.msra.mxu0 0.0
    %184 = vmatpush.xpose.msra.mxu0 0.0
    %185 = vmatpush.xpose.msra.mxu0 0.0
    %186 = vmatpush.xpose.msra.mxu0 0.0
    %187 = vmatpush.xpose.msra.mxu0 0.0
    %188 = vmatpush.xpose.msra.mxu0 0.0
    %189 = vmatpush.xpose.msra.mxu0 0.0
    %190 = vmatpush.xpose.msra.mxu0 0.0
    %191 = vmatpush.xpose.msra.mxu0 0.0
    %192 = vmatpush.xpose.msra.mxu0 0.0
    %193 = vmatpush.xpose.msra.mxu0 0.0
    %194 = vmatpush.xpose.msra.mxu0 0.0
    %195 = vmatpush.xpose.msra.mxu0 0.0
    %196 = vmatpush.xpose.msra.mxu0 0.0
    %197 = vmatpush.xpose.msra.mxu0 0.0
    %198 = vmatpush.xpose.msra.mxu0 %v181
    %199 = vmatmul.f32.gmra.mxu0 %v179
    %v200 = vpop.f32.mrf.mxu0
    %v201 = vadd.f32 %v174, %v200
    %202 = vdwg.mxu0
    %vm203 = vcmask 64512
    %v204 = vsel %vm203, %v201, -inf
    %205 = vmax.xlane.f32.xlu0 %v204
    %v206 = vpop.xlane.xlu0 %205
    %v207 = vsub.f32 %v201, %v206
    %v208 = vmul.f32 %v207, 1.442695
    %v209 = vpow.pop %v208
    %v210 = vsel %vm203, %v209, 0.0
    %211 = vadd.xlane.f32.xlu0 %v210
    %v212 = vpop.xlane.xlu0 %211
    %v213 = vrcp.pop %v212
    %v214 = vmul.f32 %v209, %v213
    %215 = vrot.lane.b32.xlu0 %v165, 64
    %v216 = vpop.permute.xlu0 %215
    %v219 = vsel %vm203, %v214, 0
    %221 = vmatpush.msra.mxu0 0.0
    %222 = vmatpush.msra.mxu0 0.0
    %223 = vmatpush.msra.mxu0 0.0
    %224 = vmatpush.msra.mxu0 0.0
    %225 = vmatpush.msra.mxu0 0.0
    %226 = vmatpush.msra.mxu0 0.0
    %227 = vmatpush.msra.mxu0 0.0
    %228 = vmatpush.msra.mxu0 0.0
    %229 = vmatpush.msra.mxu0 0.0
    %230 = vmatpush.msra.mxu0 0.0
    %231 = vmatpush.msra.mxu0 0.0
    %232 = vmatpush.msra.mxu0 0.0
    %233 = vmatpush.msra.mxu0 0.0
    %234 = vmatpush.msra.mxu0 0.0
    %235 = vmatpush.msra.mxu0 0.0
    %236 = vmatpush.msra.mxu0 %v216
    %237 = vmatmul.f32.gmra.mxu0 %v219
    %v238 = vpop.f32.mrf.mxu0
    %v239 = vadd.f32 0.0, %v238
    %240 = vdwg.mxu0
    %241 = vrot.lane.b32.xlu0 %v165, 112
    %v242 = vpop.permute.xlu0 %241
    %243 = vrot.lane.b32.xlu0 %v165, 80
    %v244 = vpop.permute.xlu0 %243
    %v245 = vsel %vm178, %v242, 0
    %v247 = vsel %vm178, %v244, 0
    %249 = vmatpush.xpose.msra.mxu0 0.0
    %250 = vmatpush.xpose.msra.mxu0 0.0
    %251 = vmatpush.xpose.msra.mxu0 0.0
    %252 = vmatpush.xpose.msra.mxu0 0.0
    %253 = vmatpush.xpose.msra.mxu0 0.0
    %254 = vmatpush.xpose.msra.mxu0 0.0
    %255 = vmatpush.xpose.msra.mxu0 0.0
    %256 = vmatpush.xpose.msra.mxu0 0.0
    %257 = vmatpush.xpose.msra.mxu0 0.0
    %258 = vmatpush.xpose.msra.mxu0 0.0
    %259 = vmatpush.xpose.msra.mxu0 0.0
    %260 = vmatpush.xpose.msra.mxu0 0.0
    %261 = vmatpush.xpose.msra.mxu0 0.0
    %262 = vmatpush.xpose.msra.mxu0 0.0
    %263 = vmatpush.xpose.msra.mxu0 0.0
    %264 = vmatpush.xpose.msra.mxu0 %v247
    %265 = vmatmul.f32.gmra.mxu0 %v245
    %v266 = vpop.f32.mrf.mxu0
    %v267 = vadd.f32 %v174, %v266
    %268 = vdwg.mxu0
    %v269 = vsel %vm203, %v267, -inf
    %270 = vmax.xlane.f32.xlu0 %v269
    %v271 = vpop.xlane.xlu0 %270
    %v272 = vsub.f32 %v267, %v271
    %v273 = vmul.f32 %v272, 1.442695
    %v274 = vpow.pop %v273
    %v275 = vsel %vm203, %v274, 0.0
    %276 = vadd.xlane.f32.xlu0 %v275
    %v277 = vpop.xlane.xlu0 %276
    %v278 = vrcp.pop %v277
    %v279 = vmul.f32 %v274, %v278
    %280 = vrot.lane.b32.xlu0 %v165, 48
    %v281 = vpop.permute.xlu0 %280
    %v284 = vsel %vm203, %v279, 0
    %286 = vmatpush.msra.mxu0 0.0
    %287 = vmatpush.msra.mxu0 0.0
    %288 = vmatpush.msra.mxu0 0.0
    %289 = vmatpush.msra.mxu0 0.0
    %290 = vmatpush.msra.mxu0 0.0
    %291 = vmatpush.msra.mxu0 0.0
    %292 = vmatpush.msra.mxu0 0.0
    %293 = vmatpush.msra.mxu0 0.0
    %294 = vmatpush.msra.mxu0 0.0
    %295 = vmatpush.msra.mxu0 0.0
    %296 = vmatpush.msra.mxu0 0.0
    %297 = vmatpush.msra.mxu0 0.0
    %298 = vmatpush.msra.mxu0 0.0
    %299 = vmatpush.msra.mxu0 0.0
    %300 = vmatpush.msra.mxu0 0.0
    %301 = vmatpush.msra.mxu0 %v281
    %302 = vmatmul.f32.gmra.mxu0 %v284
    %v303 = vpop.f32.mrf.mxu0
    %v304 = vadd.f32 0.0, %v303
    %305 = vdwg.mxu0
    %v307 = vsel %vm178, %v304, 0
    %309 = vmatpush.msra.mxu0 0.0
    %310 = vmatpush.msra.mxu0 0.0
    %311 = vmatpush.msra.mxu0 0.0
    %312 = vmatpush.msra.mxu0 0.0
    %313 = vmatpush.msra.mxu0 0.0
    %314 = vmatpush.msra.mxu0 0.0
    %315 = vmatpush.msra.mxu0 0.0
    %316 = vmatpush.msra.mxu0 0.0
    %317 = vmatpush.msra.mxu0 0.0
    %318 = vmatpush.msra.mxu0 0.0
    %319 = vmatpush.msra.mxu0 0.0
    %320 = vmatpush.msra.mxu0 0.0
    %321 = vmatpush.msra.mxu0 0.0
    %322 = vmatpush.msra.mxu0 0.0
    %323 = vmatpush.msra.mxu0 %v173
    %324 = vmatpush.msra.mxu0 %v172
    %325 = vmatmul.f32.gmra.mxu0 %v307
    %v326 = vpop.f32.mrf.mxu0
    %v327 = vadd.f32 0.0, %v326
    %328 = vdwg.mxu0
    %v330 = vsel %vm178, %v239, 0
    %332 = vmatpush.msra.mxu0 0.0
    %333 = vmatpush.msra.mxu0 0.0
    %334 = vmatpush.msra.mxu0 0.0
    %335 = vmatpush.msra.mxu0 0.0
    %336 = vmatpush.msra.mxu0 0.0
    %337 = vmatpush.msra.mxu0 0.0
    %338 = vmatpush.msra.mxu0 0.0
    %339 = vmatpush.msra.mxu0 0.0
    %340 = vmatpush.msra.mxu0 0.0
    %341 = vmatpush.msra.mxu0 0.0
    %342 = vmatpush.msra.mxu0 0.0
    %343 = vmatpush.msra.mxu0 0.0
    %344 = vmatpush.msra.mxu0 0.0
    %345 = vmatpush.msra.mxu0 0.0
    %346 = vmatpush.msra.mxu0 %v171
    %347 = vmatpush.msra.mxu0 %v170
    %348 = vmatmul.f32.gmra.mxu0 %v330
    %v349 = vpop.f32.mrf.mxu0
    %v350 = vadd.f32 %v327, %v349
    %351 = vdwg.mxu0
    %v352 = vperm.slane %v68, 1
    %354 = vrot.lane.b32.xlu0 %v168, 96
    %v355 = vpop.permute.xlu0 %354
    %v356 = vsel %vm178, %v168, 0
    %v358 = vsel %vm178, %v355, 0
    %360 = vmatpush.xpose.msra.mxu0 0.0
    %361 = vmatpush.xpose.msra.mxu0 0.0
    %362 = vmatpush.xpose.msra.mxu0 0.0
    %363 = vmatpush.xpose.msra.mxu0 0.0
    %364 = vmatpush.xpose.msra.mxu0 0.0
    %365 = vmatpush.xpose.msra.mxu0 0.0
    %366 = vmatpush.xpose.msra.mxu0 0.0
    %367 = vmatpush.xpose.msra.mxu0 0.0
    %368 = vmatpush.xpose.msra.mxu0 0.0
    %369 = vmatpush.xpose.msra.mxu0 0.0
    %370 = vmatpush.xpose.msra.mxu0 0.0
    %371 = vmatpush.xpose.msra.mxu0 0.0
    %372 = vmatpush.xpose.msra.mxu0 0.0
    %373 = vmatpush.xpose.msra.mxu0 0.0
    %374 = vmatpush.xpose.msra.mxu0 0.0
    %375 = vmatpush.xpose.msra.mxu0 %v358
    %376 = vmatmul.f32.gmra.mxu0 %v356
    %v377 = vpop.f32.mrf.mxu0
    %v378 = vadd.f32 %v352, %v377
    %379 = vdwg.mxu0
    %v380 = vsel %vm203, %v378, -inf
    %381 = vmax.xlane.f32.xlu0 %v380
    %v382 = vpop.xlane.xlu0 %381
    %v383 = vsub.f32 %v378, %v382
    %v384 = vmul.f32 %v383, 1.442695
    %v385 = vpow.pop %v384
    %v386 = vsel %vm203, %v385, 0.0
    %387 = vadd.xlane.f32.xlu0 %v386
    %v388 = vpop.xlane.xlu0 %387
    %v389 = vrcp.pop %v388
    %v390 = vmul.f32 %v385, %v389
    %391 = vrot.lane.b32.xlu0 %v168, 64
    %v392 = vpop.permute.xlu0 %391
    %v395 = vsel %vm203, %v390, 0
    %397 = vmatpush.msra.mxu0 0.0
    %398 = vmatpush.msra.mxu0 0.0
    %399 = vmatpush.msra.mxu0 0.0
    %400 = vmatpush.msra.mxu0 0.0
    %401 = vmatpush.msra.mxu0 0.0
    %402 = vmatpush.msra.mxu0 0.0
    %403 = vmatpush.msra.mxu0 0.0
    %404 = vmatpush.msra.mxu0 0.0
    %405 = vmatpush.msra.mxu0 0.0
    %406 = vmatpush.msra.mxu0 0.0
    %407 = vmatpush.msra.mxu0 0.0
    %408 = vmatpush.msra.mxu0 0.0
    %409 = vmatpush.msra.mxu0 0.0
    %410 = vmatpush.msra.mxu0 0.0
    %411 = vmatpush.msra.mxu0 0.0
    %412 = vmatpush.msra.mxu0 %v392
    %413 = vmatmul.f32.gmra.mxu0 %v395
    %v414 = vpop.f32.mrf.mxu0
    %v415 = vadd.f32 0.0, %v414
    %416 = vdwg.mxu0
    %417 = vrot.lane.b32.xlu0 %v168, 112
    %v418 = vpop.permute.xlu0 %417
    %419 = vrot.lane.b32.xlu0 %v168, 80
    %v420 = vpop.permute.xlu0 %419
    %v421 = vsel %vm178, %v418, 0
    %v423 = vsel %vm178, %v420, 0
    %425 = vmatpush.xpose.msra.mxu0 0.0
    %426 = vmatpush.xpose.msra.mxu0 0.0
    %427 = vmatpush.xpose.msra.mxu0 0.0
    %428 = vmatpush.xpose.msra.mxu0 0.0
    %429 = vmatpush.xpose.msra.mxu0 0.0
    %430 = vmatpush.xpose.msra.mxu0 0.0
    %431 = vmatpush.xpose.msra.mxu0 0.0
    %432 = vmatpush.xpose.msra.mxu0 0.0
    %433 = vmatpush.xpose.msra.mxu0 0.0
    %434 = vmatpush.xpose.msra.mxu0 0.0
    %435 = vmatpush.xpose.msra.mxu0 0.0
    %436 = vmatpush.xpose.msra.mxu0 0.0
    %437 = vmatpush.xpose.msra.mxu0 0.0
    %438 = vmatpush.xpose.msra.mxu0 0.0
    %439 = vmatpush.xpose.msra.mxu0 0.0
    %440 = vmatpush.xpose.msra.mxu0 %v423
    %441 = vmatmul.f32.gmra.mxu0 %v421
    %v442 = vpop.f32.mrf.mxu0
    %v443 = vadd.f32 %v352, %v442
    %444 = vdwg.mxu0
    %v445 = vsel %vm203, %v443, -inf
    %446 = vmax.xlane.f32.xlu0 %v445
    %v447 = vpop.xlane.xlu0 %446
    %v448 = vsub.f32 %v443, %v447
    %v449 = vmul.f32 %v448, 1.442695
    %v450 = vpow.pop %v449
    %v451 = vsel %vm203, %v450, 0.0
    %452 = vadd.xlane.f32.xlu0 %v451
    %v453 = vpop.xlane.xlu0 %452
    %v454 = vrcp.pop %v453
    %v455 = vmul.f32 %v450, %v454
    %456 = vrot.lane.b32.xlu0 %v168, 48
    %v457 = vpop.permute.xlu0 %456
    %v460 = vsel %vm203, %v455, 0
    %462 = vmatpush.msra.mxu0 0.0
    %463 = vmatpush.msra.mxu0 0.0
    %464 = vmatpush.msra.mxu0 0.0
    %465 = vmatpush.msra.mxu0 0.0
    %466 = vmatpush.msra.mxu0 0.0
    %467 = vmatpush.msra.mxu0 0.0
    %468 = vmatpush.msra.mxu0 0.0
    %469 = vmatpush.msra.mxu0 0.0
    %470 = vmatpush.msra.mxu0 0.0
    %471 = vmatpush.msra.mxu0 0.0
    %472 = vmatpush.msra.mxu0 0.0
    %473 = vmatpush.msra.mxu0 0.0
    %474 = vmatpush.msra.mxu0 0.0
    %475 = vmatpush.msra.mxu0 0.0
    %476 = vmatpush.msra.mxu0 0.0
    %477 = vmatpush.msra.mxu0 %v457
    %478 = vmatmul.f32.gmra.mxu0 %v460
    %v479 = vpop.f32.mrf.mxu0
    %v480 = vadd.f32 0.0, %v479
    %481 = vdwg.mxu0
    %v483 = vsel %vm178, %v480, 0
    %485 = vmatpush.msra.mxu0 0.0
    %486 = vmatpush.msra.mxu0 0.0
    %487 = vmatpush.msra.mxu0 0.0
    %488 = vmatpush.msra.mxu0 0.0
    %489 = vmatpush.msra.mxu0 0.0
    %490 = vmatpush.msra.mxu0 0.0
    %491 = vmatpush.msra.mxu0 0.0
    %492 = vmatpush.msra.mxu0 0.0
    %493 = vmatpush.msra.mxu0 0.0
    %494 = vmatpush.msra.mxu0 0.0
    %495 = vmatpush.msra.mxu0 0.0
    %496 = vmatpush.msra.mxu0 0.0
    %497 = vmatpush.msra.mxu0 0.0
    %498 = vmatpush.msra.mxu0 0.0
    %499 = vmatpush.msra.mxu0 %v173
    %500 = vmatpush.msra.mxu0 %v172
    %501 = vmatmul.f32.gmra.mxu0 %v483
    %v502 = vpop.f32.mrf.mxu0
    %v503 = vadd.f32 0.0, %v502
    %504 = vdwg.mxu0
    %v506 = vsel %vm178, %v415, 0
    %508 = vmatpush.msra.mxu0 0.0
    %509 = vmatpush.msra.mxu0 0.0
    %510 = vmatpush.msra.mxu0 0.0
    %511 = vmatpush.msra.mxu0 0.0
    %512 = vmatpush.msra.mxu0 0.0
    %513 = vmatpush.msra.mxu0 0.0
    %514 = vmatpush.msra.mxu0 0.0
    %515 = vmatpush.msra.mxu0 0.0
    %516 = vmatpush.msra.mxu0 0.0
    %517 = vmatpush.msra.mxu0 0.0
    %518 = vmatpush.msra.mxu0 0.0
    %519 = vmatpush.msra.mxu0 0.0
    %520 = vmatpush.msra.mxu0 0.0
    %521 = vmatpush.msra.mxu0 0.0
    %522 = vmatpush.msra.mxu0 %v171
    %523 = vmatpush.msra.mxu0 %v170
    %524 = vmatmul.f32.gmra.mxu0 %v506
    %v525 = vpop.f32.mrf.mxu0
    %v526 = vadd.f32 %v503, %v525
    %527 = vdwg.mxu0
    %v528 = vld [vmem:[%s7] sm:$0x1]
    %v530 = vperm.slane %v528, 0
    %v532 = vadd.f32 %v350, %v530
    %v533 = vadd.f32 %v526, %v530
    %v534 = vadd.f32 %v532, %v131
    %v535 = vadd.f32 %v533, %v132
    %v536 = vld [vmem:[%s8] sm:$0x1]
    %v537 = vld [vmem:[%s9] sm:$0x1]
    %v538 = vsel %vm71, %v534, 0.0
    %539 = vadd.xlane.f32.xlu0 %v538
    %v540 = vpop.xlane.xlu0 %539
    %v541 = vsel %vm71, %v535, 0.0
    %542 = vadd.xlane.f32.xlu0 %v541
    %v543 = vpop.xlane.xlu0 %542
    %v544 = vmul.f32 %v540, %v84
    %v545 = vmul.f32 %v543, %v84
    %v546 = vsub.f32 %v534, %v544
    %v547 = vsub.f32 %v535, %v545
    %v548 = vmul.f32 %v546, %v546
    %v549 = vmul.f32 %v547, %v547
    %v550 = vsel %vm71, %v548, 0.0
    %551 = vadd.xlane.f32.xlu0 %v550
    %v552 = vpop.xlane.xlu0 %551
    %v553 = vsel %vm71, %v549, 0.0
    %554 = vadd.xlane.f32.xlu0 %v553
    %v555 = vpop.xlane.xlu0 %554
    %v556 = vmul.f32 %v552, %v84
    %v557 = vmul.f32 %v555, %v84
    %v558 = vadd.f32 %v556, 1e-12
    %v559 = vadd.f32 %v557, 1e-12
    %v560 = vrsqrt.pop %v558
    %v561 = vmul.f32 %v560, %v558
    %v562 = vmul.f32 %v561, %v560
    %v563 = vmul.f32 0.5, %v562
    %v564 = vsub.f32 1.5, %v563
    %v565 = vmul.f32 %v560, %v564
    %vm566 = vweird.f32 %v558
    %vm567 = vweird.f32 %v560
    %vm568 = vmor %vm566, %vm567
    %v569 = vsel %vm568, %v560, %v565
    %v570 = vrsqrt.pop %v559
    %v571 = vmul.f32 %v570, %v559
    %v572 = vmul.f32 %v571, %v570
    %v573 = vmul.f32 0.5, %v572
    %v574 = vsub.f32 1.5, %v573
    %v575 = vmul.f32 %v570, %v574
    %vm576 = vweird.f32 %v559
    %vm577 = vweird.f32 %v570
    %vm578 = vmor %vm576, %vm577
    %v579 = vsel %vm578, %v570, %v575
    %v580 = vmul.f32 %v546, %v569
    %v581 = vmul.f32 %v547, %v579
    %v583 = vperm.slane %v536, 0
    %v585 = vmul.f32 %v580, %v583
    %v586 = vmul.f32 %v581, %v583
    %v588 = vperm.slane %v537, 0
    %v590 = vadd.f32 %v585, %v588
    %v591 = vadd.f32 %v586, %v588
    %v592 = vld [vmem:[%s10] sm:$0xff]
    %v593 = vld [vmem:[%s10 + $0x8] sm:$0xff]
    %v594 = vld [vmem:[%s10 + $0x10] sm:$0xff]
    %v595 = vld [vmem:[%s10 + $0x18] sm:$0xff]
    %v596 = vld [vmem:[%s11] sm:$0x1]
    %v598 = vperm.slane %v596, 0
    %v601 = vsel %vm71, %v590, 0
    %v604 = vsel %vm71, %v591, 0
    %606 = vmatpush.msra.mxu0 0.0
    %607 = vmatpush.msra.mxu0 0.0
    %608 = vmatpush.msra.mxu0 0.0
    %609 = vmatpush.msra.mxu0 0.0
    %610 = vmatpush.msra.mxu0 0.0
    %611 = vmatpush.msra.mxu0 0.0
    %612 = vmatpush.msra.mxu0 0.0
    %613 = vmatpush.msra.mxu0 0.0
    %614 = vmatpush.msra.mxu0 0.0
    %615 = vmatpush.msra.mxu0 0.0
    %616 = vmatpush.msra.mxu0 0.0
    %617 = vmatpush.msra.mxu0 0.0
    %618 = vmatpush.msra.mxu0 %v595
    %619 = vmatpush.msra.mxu0 %v594
    %620 = vmatpush.msra.mxu0 %v593
    %621 = vmatpush.msra.mxu0 %v592
    %622 = vmatmul.f32.gmra.mxu0 %v601
    %v623 = vpop.f32.mrf.mxu0
    %v624 = vadd.f32 %v598, %v623
    %625 = vmatmul.f32.gmra.mxu0 %v604
    %v626 = vpop.f32.mrf.mxu0
    %v627 = vadd.f32 %v598, %v626
    %628 = vdwg.mxu0
    %v629 = vmul.f32 %v624, 0.5
    %v630 = vmul.f32 %v627, 0.5
    %v631 = vmul.f32 %v624, 0.044715
    %v632 = vmul.f32 %v627, 0.044715
    %v633 = vmul.f32 %v631, %v624
    %v634 = vmul.f32 %v632, %v627
    %v635 = vmul.f32 %v633, %v624
    %v636 = vmul.f32 %v634, %v627
    %v637 = vadd.f32 %v624, %v635
    %v638 = vadd.f32 %v627, %v636
    %v639 = vmul.f32 %v637, 0.7978846
    %v640 = vmul.f32 %v638, 0.7978846
    %v641 = vtanh.pop %v639
    %v642 = vtanh.pop %v640
    %v643 = vadd.f32 %v641, 1.0
    %v644 = vadd.f32 %v642, 1.0
    %v645 = vmul.f32 %v629, %v643
    %v646 = vmul.f32 %v630, %v644
    %v647 = vld [vmem:[%s12] sm:$0xff]
    %v648 = vld [vmem:[%s12 + $0x8] sm:$0xff]
    %v649 = vld [vmem:[%s12 + $0x10] sm:$0xff]
    %v650 = vld [vmem:[%s12 + $0x18] sm:$0xff]
    %v651 = vld [vmem:[%s12 + $0x20] sm:$0xff]
    %v652 = vld [vmem:[%s12 + $0x28] sm:$0xff]
    %v653 = vld [vmem:[%s12 + $0x30] sm:$0xff]
    %v654 = vld [vmem:[%s12 + $0x38] sm:$0xff]
    %v655 = vld [vmem:[%s13] sm:$0x1]
    %v657 = vperm.slane %v655, 0
    %vm659 = vcmask 523264
    %v661 = vsel %vm659, %v645, 0
    %v664 = vsel %vm659, %v646, 0
    %666 = vmatpush.msra.mxu0 0.0
    %667 = vmatpush.msra.mxu0 0.0
    %668 = vmatpush.msra.mxu0 0.0
    %669 = vmatpush.msra.mxu0 0.0
    %670 = vmatpush.msra.mxu0 0.0
    %671 = vmatpush.msra.mxu0 0.0
    %672 = vmatpush.msra.mxu0 0.0
    %673 = vmatpush.msra.mxu0 0.0
    %674 = vmatpush.msra.mxu0 %v654
    %675 = vmatpush.msra.mxu0 %v653
    %676 = vmatpush.msra.mxu0 %v652
    %677 = vmatpush.msra.mxu0 %v651
    %678 = vmatpush.msra.mxu0 %v650
    %679 = vmatpush.msra.mxu0 %v649
    %680 = vmatpush.msra.mxu0 %v648
    %681 = vmatpush.msra.mxu0 %v647
    %682 = vmatmul.f32.gmra.mxu0 %v661
    %v683 = vpop.f32.mrf.mxu0
    %v684 = vadd.f32 %v657, %v683
    %685 = vmatmul.f32.gmra.mxu0 %v664
    %v686 = vpop.f32.mrf.mxu0
    %v687 = vadd.f32 %v657, %v686
    %688 = vdwg.mxu0
    %v689 = vadd.f32 %v684, %v590
    %v690 = vadd.f32 %v687, %v591
    %v691 = vld [vmem:[%s14] sm:$0x1]
    %v692 = vld [vmem:[%s15] sm:$0x1]
    %v693 = vsel %vm71, %v689, 0.0
    %694 = vadd.xlane.f32.xlu0 %v693
    %v695 = vpop.xlane.xlu0 %694
    %v696 = vsel %vm71, %v690, 0.0
    %697 = vadd.xlane.f32.xlu0 %v696
    %v698 = vpop.xlane.xlu0 %697
    %v699 = vmul.f32 %v695, %v84
    %v700 = vmul.f32 %v698, %v84
    %v701 = vsub.f32 %v689, %v699
    %v702 = vsub.f32 %v690, %v700
    %v703 = vmul.f32 %v701, %v701
    %v704 = vmul.f32 %v702, %v702
    %v705 = vsel %vm71, %v703, 0.0
    %706 = vadd.xlane.f32.xlu0 %v705
    %v707 = vpop.xlane.xlu0 %706
    %v708 = vsel %vm71, %v704, 0.0
    %709 = vadd.xlane.f32.xlu0 %v708
    %v710 = vpop.xlane.xlu0 %709
    %v711 = vmul.f32 %v707, %v84
    %v712 = vmul.f32 %v710, %v84
    %v713 = vadd.f32 %v711, 1e-12
    %v714 = vadd.f32 %v712, 1e-12
    %v715 = vrsqrt.pop %v713
    %v716 = vmul.f32 %v715, %v713
    %v717 = vmul.f32 %v716, %v715
    %v718 = vmul.f32 0.5, %v717
    %v719 = vsub.f32 1.5, %v718
    %v720 = vmul.f32 %v715, %v719
    %vm721 = vweird.f32 %v713
    %vm722 = vweird.f32 %v715
    %vm723 = vmor %vm721, %vm722
    %v724 = vsel %vm723, %v715, %v720
    %v725 = vrsqrt.pop %v714
    %v726 = vmul.f32 %v725, %v714
    %v727 = vmul.f32 %v726, %v725
    %v728 = vmul.f32 0.5, %v727
    %v729 = vsub.f32 1.5, %v728
    %v730 = vmul.f32 %v725, %v729
    %vm731 = vweird.f32 %v714
    %vm732 = vweird.f32 %v725
    %vm733 = vmor %vm731, %vm732
    %v734 = vsel %vm733, %v725, %v730
    %v735 = vmul.f32 %v701, %v724
    %v736 = vmul.f32 %v702, %v734
    %v738 = vperm.slane %v691, 0
    %v740 = vmul.f32 %v735, %v738
    %v741 = vmul.f32 %v736, %v738
    %v743 = vperm.slane %v692, 0
    %v745 = vadd.f32 %v740, %v743
    %v746 = vadd.f32 %v741, %v743
    %s747 = scalar_lea.vmem %s4, 32
    %v748 = vld [vmem:[%s747] sm:$0xff]
    %v749 = vld [vmem:[%s747 + $0x8] sm:$0xff]
    %v750 = vld [vmem:[%s747 + $0x10] sm:$0xff]
    %v751 = vld [vmem:[%s747 + $0x18] sm:$0xff]
    %s752 = scalar_lea.vmem %s5, 1
    %v753 = vld [vmem:[%s752] sm:$0x1]
    %v755 = vperm.slane %v753, 0
    %v758 = vsel %vm71, %v745, 0
    %v761 = vsel %vm71, %v746, 0
    %763 = vmatpush.msra.mxu0 0.0
    %764 = vmatpush.msra.mxu0 0.0
    %765 = vmatpush.msra.mxu0 0.0
    %766 = vmatpush.msra.mxu0 0.0
    %767 = vmatpush.msra.mxu0 0.0
    %768 = vmatpush.msra.mxu0 0.0
    %769 = vmatpush.msra.mxu0 0.0
    %770 = vmatpush.msra.mxu0 0.0
    %771 = vmatpush.msra.mxu0 0.0
    %772 = vmatpush.msra.mxu0 0.0
    %773 = vmatpush.msra.mxu0 0.0
    %774 = vmatpush.msra.mxu0 0.0
    %775 = vmatpush.msra.mxu0 %v751
    %776 = vmatpush.msra.mxu0 %v750
    %777 = vmatpush.msra.mxu0 %v749
    %778 = vmatpush.msra.mxu0 %v748
    %779 = vmatmul.f32.gmra.mxu0 %v758
    %v780 = vpop.f32.mrf.mxu0
    %v781 = vadd.f32 %v755, %v780
    %782 = vmatmul.f32.gmra.mxu0 %v761
    %v783 = vpop.f32.mrf.mxu0
    %v784 = vadd.f32 %v755, %v783
    %785 = vdwg.mxu0
    %s786 = scalar_lea.vmem %s6, 32
    %v787 = vld [vmem:[%s786] sm:$0xff]
    %v788 = vld [vmem:[%s786 + $0x8] sm:$0xff]
    %v789 = vld [vmem:[%s786 + $0x10] sm:$0xff]
    %v790 = vld [vmem:[%s786 + $0x18] sm:$0xff]
    %792 = vrot.lane.b32.xlu0 %v781, 96
    %v793 = vpop.permute.xlu0 %792
    %v794 = vsel %vm178, %v781, 0
    %v796 = vsel %vm178, %v793, 0
    %798 = vmatpush.xpose.msra.mxu0 0.0
    %799 = vmatpush.xpose.msra.mxu0 0.0
    %800 = vmatpush.xpose.msra.mxu0 0.0
    %801 = vmatpush.xpose.msra.mxu0 0.0
    %802 = vmatpush.xpose.msra.mxu0 0.0
    %803 = vmatpush.xpose.msra.mxu0 0.0
    %804 = vmatpush.xpose.msra.mxu0 0.0
    %805 = vmatpush.xpose.msra.mxu0 0.0
    %806 = vmatpush.xpose.msra.mxu0 0.0
    %807 = vmatpush.xpose.msra.mxu0 0.0
    %808 = vmatpush.xpose.msra.mxu0 0.0
    %809 = vmatpush.xpose.msra.mxu0 0.0
    %810 = vmatpush.xpose.msra.mxu0 0.0
    %811 = vmatpush.xpose.msra.mxu0 0.0
    %812 = vmatpush.xpose.msra.mxu0 0.0
    %813 = vmatpush.xpose.msra.mxu0 %v796
    %814 = vmatmul.f32.gmra.mxu0 %v794
    %v815 = vpop.f32.mrf.mxu0
    %v816 = vadd.f32 %v174, %v815
    %817 = vdwg.mxu0
    %v818 = vsel %vm203, %v816, -inf
    %819 = vmax.xlane.f32.xlu0 %v818
    %v820 = vpop.xlane.xlu0 %819
    %v821 = vsub.f32 %v816, %v820
    %v822 = vmul.f32 %v821, 1.442695
    %v823 = vpow.pop %v822
    %v824 = vsel %vm203, %v823, 0.0
    %825 = vadd.xlane.f32.xlu0 %v824
    %v826 = vpop.xlane.xlu0 %825
    %v827 = vrcp.pop %v826
    %v828 = vmul.f32 %v823, %v827
    %829 = vrot.lane.b32.xlu0 %v781, 64
    %v830 = vpop.permute.xlu0 %829
    %v833 = vsel %vm203, %v828, 0
    %835 = vmatpush.msra.mxu0 0.0
    %836 = vmatpush.msra.mxu0 0.0
    %837 = vmatpush.msra.mxu0 0.0
    %838 = vmatpush.msra.mxu0 0.0
    %839 = vmatpush.msra.mxu0 0.0
    %840 = vmatpush.msra.mxu0 0.0
    %841 = vmatpush.msra.mxu0 0.0
    %842 = vmatpush.msra.mxu0 0.0
    %843 = vmatpush.msra.mxu0 0.0
    %844 = vmatpush.msra.mxu0 0.0
    %845 = vmatpush.msra.mxu0 0.0
    %846 = vmatpush.msra.mxu0 0.0
    %847 = vmatpush.msra.mxu0 0.0
    %848 = vmatpush.msra.mxu0 0.0
    %849 = vmatpush.msra.mxu0 0.0
    %850 = vmatpush.msra.mxu0 %v830
    %851 = vmatmul.f32.gmra.mxu0 %v833
    %v852 = vpop.f32.mrf.mxu0
    %v853 = vadd.f32 0.0, %v852
    %854 = vdwg.mxu0
    %855 = vrot.lane.b32.xlu0 %v781, 112
    %v856 = vpop.permute.xlu0 %855
    %857 = vrot.lane.b32.xlu0 %v781, 80
    %v858 = vpop.permute.xlu0 %857
    %v859 = vsel %vm178, %v856, 0
    %v861 = vsel %vm178, %v858, 0
    %863 = vmatpush.xpose.msra.mxu0 0.0
    %864 = vmatpush.xpose.msra.mxu0 0.0
    %865 = vmatpush.xpose.msra.mxu0 0.0
    %866 = vmatpush.xpose.msra.mxu0 0.0
    %867 = vmatpush.xpose.msra.mxu0 0.0
    %868 = vmatpush.xpose.msra.mxu0 0.0
    %869 = vmatpush.xpose.msra.mxu0 0.0
    %870 = vmatpush.xpose.msra.mxu0 0.0
    %871 = vmatpush.xpose.msra.mxu0 0.0
    %872 = vmatpush.xpose.msra.mxu0 0.0
    %873 = vmatpush.xpose.msra.mxu0 0.0
    %874 = vmatpush.xpose.msra.mxu0 0.0
    %875 = vmatpush.xpose.msra.mxu0 0.0
    %876 = vmatpush.xpose.msra.mxu0 0.0
    %877 = vmatpush.xpose.msra.mxu0 0.0
    %878 = vmatpush.xpose.msra.mxu0 %v861
    %879 = vmatmul.f32.gmra.mxu0 %v859
    %v880 = vpop.f32.mrf.mxu0
    %v881 = vadd.f32 %v174, %v880
    %882 = vdwg.mxu0
    %v883 = vsel %vm203, %v881, -inf
    %884 = vmax.xlane.f32.xlu0 %v883
    %v885 = vpop.xlane.xlu0 %884
    %v886 = vsub.f32 %v881, %v885
    %v887 = vmul.f32 %v886, 1.442695
    %v888 = vpow.pop %v887
    %v889 = vsel %vm203, %v888, 0.0
    %890 = vadd.xlane.f32.xlu0 %v889
    %v891 = vpop.xlane.xlu0 %890
    %v892 = vrcp.pop %v891
    %v893 = vmul.f32 %v888, %v892
    %894 = vrot.lane.b32.xlu0 %v781, 48
    %v895 = vpop.permute.xlu0 %894
    %v898 = vsel %vm203, %v893, 0
    %900 = vmatpush.msra.mxu0 0.0
    %901 = vmatpush.msra.mxu0 0.0
    %902 = vmatpush.msra.mxu0 0.0
    %903 = vmatpush.msra.mxu0 0.0
    %904 = vmatpush.msra.mxu0 0.0
    %905 = vmatpush.msra.mxu0 0.0
    %906 = vmatpush.msra.mxu0 0.0
    %907 = vmatpush.msra.mxu0 0.0
    %908 = vmatpush.msra.mxu0 0.0
    %909 = vmatpush.msra.mxu0 0.0
    %910 = vmatpush.msra.mxu0 0.0
    %911 = vmatpush.msra.mxu0 0.0
    %912 = vmatpush.msra.mxu0 0.0
    %913 = vmatpush.msra.mxu0 0.0
    %914 = vmatpush.msra.mxu0 0.0
    %915 = vmatpush.msra.mxu0 %v895
    %916 = vmatmul.f32.gmra.mxu0 %v898
    %v917 = vpop.f32.mrf.mxu0
    %v918 = vadd.f32 0.0, %v917
    %919 = vdwg.mxu0
    %v921 = vsel %vm178, %v918, 0
    %923 = vmatpush.msra.mxu0 0.0
    %924 = vmatpush.msra.mxu0 0.0
    %925 = vmatpush.msra.mxu0 0.0
    %926 = vmatpush.msra.mxu0 0.0
    %927 = vmatpush.msra.mxu0 0.0
    %928 = vmatpush.msra.mxu0 0.0
    %929 = vmatpush.msra.mxu0 0.0
    %930 = vmatpush.msra.mxu0 0.0
    %931 = vmatpush.msra.mxu0 0.0
    %932 = vmatpush.msra.mxu0 0.0
    %933 = vmatpush.msra.mxu0 0.0
    %934 = vmatpush.msra.mxu0 0.0
    %935 = vmatpush.msra.mxu0 0.0
    %936 = vmatpush.msra.mxu0 0.0
    %937 = vmatpush.msra.mxu0 %v790
    %938 = vmatpush.msra.mxu0 %v789
    %939 = vmatmul.f32.gmra.mxu0 %v921
    %v940 = vpop.f32.mrf.mxu0
    %v941 = vadd.f32 0.0, %v940
    %942 = vdwg.mxu0
    %v944 = vsel %vm178, %v853, 0
    %946 = vmatpush.msra.mxu0 0.0
    %947 = vmatpush.msra.mxu0 0.0
    %948 = vmatpush.msra.mxu0 0.0
    %949 = vmatpush.msra.mxu0 0.0
    %950 = vmatpush.msra.mxu0 0.0
    %951 = vmatpush.msra.mxu0 0.0
    %952 = vmatpush.msra.mxu0 0.0
    %953 = vmatpush.msra.mxu0 0.0
    %954 = vmatpush.msra.mxu0 0.0
    %955 = vmatpush.msra.mxu0 0.0
    %956 = vmatpush.msra.mxu0 0.0
    %957 = vmatpush.msra.mxu0 0.0
    %958 = vmatpush.msra.mxu0 0.0
    %959 = vmatpush.msra.mxu0 0.0
    %960 = vmatpush.msra.mxu0 %v788
    %961 = vmatpush.msra.mxu0 %v787
    %962 = vmatmul.f32.gmra.mxu0 %v944
    %v963 = vpop.f32.mrf.mxu0
    %v964 = vadd.f32 %v941, %v963
    %965 = vdwg.mxu0
    %967 = vrot.lane.b32.xlu0 %v784, 96
    %v968 = vpop.permute.xlu0 %967
    %v969 = vsel %vm178, %v784, 0
    %v971 = vsel %vm178, %v968, 0
    %973 = vmatpush.xpose.msra.mxu0 0.0
    %974 = vmatpush.xpose.msra.mxu0 0.0
    %975 = vmatpush.xpose.msra.mxu0 0.0
    %976 = vmatpush.xpose.msra.mxu0 0.0
    %977 = vmatpush.xpose.msra.mxu0 0.0
    %978 = vmatpush.xpose.msra.mxu0 0.0
    %979 = vmatpush.xpose.msra.mxu0 0.0
    %980 = vmatpush.xpose.msra.mxu0 0.0
    %981 = vmatpush.xpose.msra.mxu0 0.0
    %982 = vmatpush.xpose.msra.mxu0 0.0
    %983 = vmatpush.xpose.msra.mxu0 0.0
    %984 = vmatpush.xpose.msra.mxu0 0.0
    %985 = vmatpush.xpose.msra.mxu0 0.0
    %986 = vmatpush.xpose.msra.mxu0 0.0
    %987 = vmatpush.xpose.msra.mxu0 0.0
    %988 = vmatpush.xpose.msra.mxu0 %v971
    %989 = vmatmul.f32.gmra.mxu0 %v969
    %v990 = vpop.f32.mrf.mxu0
    %v991 = vadd.f32 %v352, %v990
    %992 = vdwg.mxu0
    %v993 = vsel %vm203, %v991, -inf
    %994 = vmax.xlane.f32.xlu0 %v993
    %v995 = vpop.xlane.xlu0 %994
    %v996 = vsub.f32 %v991, %v995
    %v997 = vmul.f32 %v996, 1.442695
    %v998 = vpow.pop %v997
    %v999 = vsel %vm203, %v998, 0.0
    %1000 = vadd.xlane.f32.xlu0 %v999
    %v1001 = vpop.xlane.xlu0 %1000
    %v1002 = vrcp.pop %v1001
    %v1003 = vmul.f32 %v998, %v1002
    %1004 = vrot.lane.b32.xlu0 %v784, 64
    %v1005 = vpop.permute.xlu0 %1004
    %v1008 = vsel %vm203, %v1003, 0
    %1010 = vmatpush.msra.mxu0 0.0
    %1011 = vmatpush.msra.mxu0 0.0
    %1012 = vmatpush.msra.mxu0 0.0
    %1013 = vmatpush.msra.mxu0 0.0
    %1014 = vmatpush.msra.mxu0 0.0
    %1015 = vmatpush.msra.mxu0 0.0
    %1016 = vmatpush.msra.mxu0 0.0
    %1017 = vmatpush.msra.mxu0 0.0
    %1018 = vmatpush.msra.mxu0 0.0
    %1019 = vmatpush.msra.mxu0 0.0
    %1020 = vmatpush.msra.mxu0 0.0
    %1021 = vmatpush.msra.mxu0 0.0
    %1022 = vmatpush.msra.mxu0 0.0
    %1023 = vmatpush.msra.mxu0 0.0
    %1024 = vmatpush.msra.mxu0 0.0
    %1025 = vmatpush.msra.mxu0 %v1005
    %1026 = vmatmul.f32.gmra.mxu0 %v1008
    %v1027 = vpop.f32.mrf.mxu0
    %v1028 = vadd.f32 0.0, %v1027
    %1029 = vdwg.mxu0
    %1030 = vrot.lane.b32.xlu0 %v784, 112
    %v1031 = vpop.permute.xlu0 %1030
    %1032 = vrot.lane.b32.xlu0 %v784, 80
    %v1033 = vpop.permute.xlu0 %1032
    %v1034 = vsel %vm178, %v1031, 0
    %v1036 = vsel %vm178, %v1033, 0
    %1038 = vmatpush.xpose.msra.mxu0 0.0
    %1039 = vmatpush.xpose.msra.mxu0 0.0
    %1040 = vmatpush.xpose.msra.mxu0 0.0
    %1041 = vmatpush.xpose.msra.mxu0 0.0
    %1042 = vmatpush.xpose.msra.mxu0 0.0
    %1043 = vmatpush.xpose.msra.mxu0 0.0
    %1044 = vmatpush.xpose.msra.mxu0 0.0
    %1045 = vmatpush.xpose.msra.mxu0 0.0
    %1046 = vmatpush.xpose.msra.mxu0 0.0
    %1047 = vmatpush.xpose.msra.mxu0 0.0
    %1048 = vmatpush.xpose.msra.mxu0 0.0
    %1049 = vmatpush.xpose.msra.mxu0 0.0
    %1050 = vmatpush.xpose.msra.mxu0 0.0
    %1051 = vmatpush.xpose.msra.mxu0 0.0
    %1052 = vmatpush.xpose.msra.mxu0 0.0
    %1053 = vmatpush.xpose.msra.mxu0 %v1036
    %1054 = vmatmul.f32.gmra.mxu0 %v1034
    %v1055 = vpop.f32.mrf.mxu0
    %v1056 = vadd.f32 %v352, %v1055
    %1057 = vdwg.mxu0
    %v1058 = vsel %vm203, %v1056, -inf
    %1059 = vmax.xlane.f32.xlu0 %v1058
    %v1060 = vpop.xlane.xlu0 %1059
    %v1061 = vsub.f32 %v1056, %v1060
    %v1062 = vmul.f32 %v1061, 1.442695
    %v1063 = vpow.pop %v1062
    %v1064 = vsel %vm203, %v1063, 0.0
    %1065 = vadd.xlane.f32.xlu0 %v1064
    %v1066 = vpop.xlane.xlu0 %1065
    %v1067 = vrcp.pop %v1066
    %v1068 = vmul.f32 %v1063, %v1067
    %1069 = vrot.lane.b32.xlu0 %v784, 48
    %v1070 = vpop.permute.xlu0 %1069
    %v1073 = vsel %vm203, %v1068, 0
    %1075 = vmatpush.msra.mxu0 0.0
    %1076 = vmatpush.msra.mxu0 0.0
    %1077 = vmatpush.msra.mxu0 0.0
    %1078 = vmatpush.msra.mxu0 0.0
    %1079 = vmatpush.msra.mxu0 0.0
    %1080 = vmatpush.msra.mxu0 0.0
    %1081 = vmatpush.msra.mxu0 0.0
    %1082 = vmatpush.msra.mxu0 0.0
    %1083 = vmatpush.msra.mxu0 0.0
    %1084 = vmatpush.msra.mxu0 0.0
    %1085 = vmatpush.msra.mxu0 0.0
    %1086 = vmatpush.msra.mxu0 0.0
    %1087 = vmatpush.msra.mxu0 0.0
    %1088 = vmatpush.msra.mxu0 0.0
    %1089 = vmatpush.msra.mxu0 0.0
    %1090 = vmatpush.msra.mxu0 %v1070
    %1091 = vmatmul.f32.gmra.mxu0 %v1073
    %v1092 = vpop.f32.mrf.mxu0
    %v1093 = vadd.f32 0.0, %v1092
    %1094 = vdwg.mxu0
    %v1096 = vsel %vm178, %v1093, 0
    %1098 = vmatpush.msra.mxu0 0.0
    %1099 = vmatpush.msra.mxu0 0.0
    %1100 = vmatpush.msra.mxu0 0.0
    %1101 = vmatpush.msra.mxu0 0.0
    %1102 = vmatpush.msra.mxu0 0.0
    %1103 = vmatpush.msra.mxu0 0.0
    %1104 = vmatpush.msra.mxu0 0.0
    %1105 = vmatpush.msra.mxu0 0.0
    %1106 = vmatpush.msra.mxu0 0.0
    %1107 = vmatpush.msra.mxu0 0.0
    %1108 = vmatpush.msra.mxu0 0.0
    %1109 = vmatpush.msra.mxu0 0.0
    %1110 = vmatpush.msra.mxu0 0.0
    %1111 = vmatpush.msra.mxu0 0.0
    %1112 = vmatpush.msra.mxu0 %v790
    %1113 = vmatpush.msra.mxu0 %v789
    %1114 = vmatmul.f32.gmra.mxu0 %v1096
    %v1115 = vpop.f32.mrf.mxu0
    %v1116 = vadd.f32 0.0, %v1115
    %1117 = vdwg.mxu0
    %v1119 = vsel %vm178, %v1028, 0
    %1121 = vmatpush.msra.mxu0 0.0
    %1122 = vmatpush.msra.mxu0 0.0
    %1123 = vmatpush.msra.mxu0 0.0
    %1124 = vmatpush.msra.mxu0 0.0
    %1125 = vmatpush.msra.mxu0 0.0
    %1126 = vmatpush.msra.mxu0 0.0
    %1127 = vmatpush.msra.mxu0 0.0
    %1128 = vmatpush.msra.mxu0 0.0
    %1129 = vmatpush.msra.mxu0 0.0
    %1130 = vmatpush.msra.mxu0 0.0
    %1131 = vmatpush.msra.mxu0 0.0
    %1132 = vmatpush.msra.mxu0 0.0
    %1133 = vmatpush.msra.mxu0 0.0
    %1134 = vmatpush.msra.mxu0 0.0
    %1135 = vmatpush.msra.mxu0 %v788
    %1136 = vmatpush.msra.mxu0 %v787
    %1137 = vmatmul.f32.gmra.mxu0 %v1119
    %v1138 = vpop.f32.mrf.mxu0
    %v1139 = vadd.f32 %v1116, %v1138
    %1140 = vdwg.mxu0
    %s1141 = scalar_lea.vmem %s7, 1
    %v1142 = vld [vmem:[%s1141] sm:$0x1]
    %v1144 = vperm.slane %v1142, 0
    %v1146 = vadd.f32 %v964, %v1144
    %v1147 = vadd.f32 %v1139, %v1144
    %v1148 = vadd.f32 %v1146, %v745
    %v1149 = vadd.f32 %v1147, %v746
    %s1150 = scalar_lea.vmem %s8, 1
    %v1151 = vld [vmem:[%s1150] sm:$0x1]
    %s1152 = scalar_lea.vmem %s9, 1
    %v1153 = vld [vmem:[%s1152] sm:$0x1]
    %v1154 = vsel %vm71, %v1148, 0.0
    %1155 = vadd.xlane.f32.xlu0 %v1154
    %v1156 = vpop.xlane.xlu0 %1155
    %v1157 = vsel %vm71, %v1149, 0.0
    %1158 = vadd.xlane.f32.xlu0 %v1157
    %v1159 = vpop.xlane.xlu0 %1158
    %v1160 = vmul.f32 %v1156, %v84
    %v1161 = vmul.f32 %v1159, %v84
    %v1162 = vsub.f32 %v1148, %v1160
    %v1163 = vsub.f32 %v1149, %v1161
    %v1164 = vmul.f32 %v1162, %v1162
    %v1165 = vmul.f32 %v1163, %v1163
    %v1166 = vsel %vm71, %v1164, 0.0
    %1167 = vadd.xlane.f32.xlu0 %v1166
    %v1168 = vpop.xlane.xlu0 %1167
    %v1169 = vsel %vm71, %v1165, 0.0
    %1170 = vadd.xlane.f32.xlu0 %v1169
    %v1171 = vpop.xlane.xlu0 %1170
    %v1172 = vmul.f32 %v1168, %v84
    %v1173 = vmul.f32 %v1171, %v84
    %v1174 = vadd.f32 %v1172, 1e-12
    %v1175 = vadd.f32 %v1173, 1e-12
    %v1176 = vrsqrt.pop %v1174
    %v1177 = vmul.f32 %v1176, %v1174
    %v1178 = vmul.f32 %v1177, %v1176
    %v1179 = vmul.f32 0.5, %v1178
    %v1180 = vsub.f32 1.5, %v1179
    %v1181 = vmul.f32 %v1176, %v1180
    %vm1182 = vweird.f32 %v1174
    %vm1183 = vweird.f32 %v1176
    %vm1184 = vmor %vm1182, %vm1183
    %v1185 = vsel %vm1184, %v1176, %v1181
    %v1186 = vrsqrt.pop %v1175
    %v1187 = vmul.f32 %v1186, %v1175
    %v1188 = vmul.f32 %v1187, %v1186
    %v1189 = vmul.f32 0.5, %v1188
    %v1190 = vsub.f32 1.5, %v1189
    %v1191 = vmul.f32 %v1186, %v1190
    %vm1192 = vweird.f32 %v1175
    %vm1193 = vweird.f32 %v1186
    %vm1194 = vmor %vm1192, %vm1193
    %v1195 = vsel %vm1194, %v1186, %v1191
    %v1196 = vmul.f32 %v1162, %v1185
    %v1197 = vmul.f32 %v1163, %v1195
    %v1199 = vperm.slane %v1151, 0
    %v1201 = vmul.f32 %v1196, %v1199
    %v1202 = vmul.f32 %v1197, %v1199
    %v1204 = vperm.slane %v1153, 0
    %v1206 = vadd.f32 %v1201, %v1204
    %v1207 = vadd.f32 %v1202, %v1204
    %s1208 = scalar_lea.vmem %s10, 32
    %v1209 = vld [vmem:[%s1208] sm:$0xff]
    %v1210 = vld [vmem:[%s1208 + $0x8] sm:$0xff]
    %v1211 = vld [vmem:[%s1208 + $0x10] sm:$0xff]
    %v1212 = vld [vmem:[%s1208 + $0x18] sm:$0xff]
    %s1213 = scalar_lea.vmem %s11, 1
    %v1214 = vld [vmem:[%s1213] sm:$0x1]
    %v1216 = vperm.slane %v1214, 0
    %v1219 = vsel %vm71, %v1206, 0
    %v1222 = vsel %vm71, %v1207, 0
    %1224 = vmatpush.msra.mxu0 0.0
    %1225 = vmatpush.msra.mxu0 0.0
    %1226 = vmatpush.msra.mxu0 0.0
    %1227 = vmatpush.msra.mxu0 0.0
    %1228 = vmatpush.msra.mxu0 0.0
    %1229 = vmatpush.msra.mxu0 0.0
    %1230 = vmatpush.msra.mxu0 0.0
    %1231 = vmatpush.msra.mxu0 0.0
    %1232 = vmatpush.msra.mxu0 0.0
    %1233 = vmatpush.msra.mxu0 0.0
    %1234 = vmatpush.msra.mxu0 0.0
    %1235 = vmatpush.msra.mxu0 0.0
    %1236 = vmatpush.msra.mxu0 %v1212
    %1237 = vmatpush.msra.mxu0 %v1211
    %1238 = vmatpush.msra.mxu0 %v1210
    %1239 = vmatpush.msra.mxu0 %v1209
    %1240 = vmatmul.f32.gmra.mxu0 %v1219
    %v1241 = vpop.f32.mrf.mxu0
    %v1242 = vadd.f32 %v1216, %v1241
    %1243 = vmatmul.f32.gmra.mxu0 %v1222
    %v1244 = vpop.f32.mrf.mxu0
    %v1245 = vadd.f32 %v1216, %v1244
    %1246 = vdwg.mxu0
    %v1247 = vmul.f32 %v1242, 0.5
    %v1248 = vmul.f32 %v1245, 0.5
    %v1249 = vmul.f32 %v1242, 0.044715
    %v1250 = vmul.f32 %v1245, 0.044715
    %v1251 = vmul.f32 %v1249, %v1242
    %v1252 = vmul.f32 %v1250, %v1245
    %v1253 = vmul.f32 %v1251, %v1242
    %v1254 = vmul.f32 %v1252, %v1245
    %v1255 = vadd.f32 %v1242, %v1253
    %v1256 = vadd.f32 %v1245, %v1254
    %v1257 = vmul.f32 %v1255, 0.7978846
    %v1258 = vmul.f32 %v1256, 0.7978846
    %v1259 = vtanh.pop %v1257
    %v1260 = vtanh.pop %v1258
    %v1261 = vadd.f32 %v1259, 1.0
    %v1262 = vadd.f32 %v1260, 1.0
    %v1263 = vmul.f32 %v1247, %v1261
    %v1264 = vmul.f32 %v1248, %v1262
    %s1265 = scalar_lea.vmem %s12, 64
    %v1266 = vld [vmem:[%s1265] sm:$0xff]
    %v1267 = vld [vmem:[%s1265 + $0x8] sm:$0xff]
    %v1268 = vld [vmem:[%s1265 + $0x10] sm:$0xff]
    %v1269 = vld [vmem:[%s1265 + $0x18] sm:$0xff]
    %v1270 = vld [vmem:[%s1265 + $0x20] sm:$0xff]
    %v1271 = vld [vmem:[%s1265 + $0x28] sm:$0xff]
    %v1272 = vld [vmem:[%s1265 + $0x30] sm:$0xff]
    %v1273 = vld [vmem:[%s1265 + $0x38] sm:$0xff]
    %s1274 = scalar_lea.vmem %s13, 1
    %v1275 = vld [vmem:[%s1274] sm:$0x1]
    %v1277 = vperm.slane %v1275, 0
    %v1280 = vsel %vm659, %v1263, 0
    %v1283 = vsel %vm659, %v1264, 0
    %1285 = vmatpush.msra.mxu0 0.0
    %1286 = vmatpush.msra.mxu0 0.0
    %1287 = vmatpush.msra.mxu0 0.0
    %1288 = vmatpush.msra.mxu0 0.0
    %1289 = vmatpush.msra.mxu0 0.0
    %1290 = vmatpush.msra.mxu0 0.0
    %1291 = vmatpush.msra.mxu0 0.0
    %1292 = vmatpush.msra.mxu0 0.0
    %1293 = vmatpush.msra.mxu0 %v1273
    %1294 = vmatpush.msra.mxu0 %v1272
    %1295 = vmatpush.msra.mxu0 %v1271
    %1296 = vmatpush.msra.mxu0 %v1270
    %1297 = vmatpush.msra.mxu0 %v1269
    %1298 = vmatpush.msra.mxu0 %v1268
    %1299 = vmatpush.msra.mxu0 %v1267
    %1300 = vmatpush.msra.mxu0 %v1266
    %1301 = vmatmul.f32.gmra.mxu0 %v1280
    %v1302 = vpop.f32.mrf.mxu0
    %v1303 = vadd.f32 %v1277, %v1302
    %1304 = vmatmul.f32.gmra.mxu0 %v1283
    %v1305 = vpop.f32.mrf.mxu0
    %v1306 = vadd.f32 %v1277, %v1305
    %1307 = vdwg.mxu0
    %v1308 = vadd.f32 %v1303, %v1206
    %v1309 = vadd.f32 %v1306, %v1207
    %s1310 = scalar_lea.vmem %s14, 1
    %v1311 = vld [vmem:[%s1310] sm:$0x1]
    %s1312 = scalar_lea.vmem %s15, 1
    %v1313 = vld [vmem:[%s1312] sm:$0x1]
    %v1314 = vsel %vm71, %v1308, 0.0
    %1315 = vadd.xlane.f32.xlu0 %v1314
    %v1316 = vpop.xlane.xlu0 %1315
    %v1317 = vsel %vm71, %v1309, 0.0
    %1318 = vadd.xlane.f32.xlu0 %v1317
    %v1319 = vpop.xlane.xlu0 %1318
    %v1320 = vmul.f32 %v1316, %v84
    %v1321 = vmul.f32 %v1319, %v84
    %v1322 = vsub.f32 %v1308, %v1320
    %v1323 = vsub.f32 %v1309, %v1321
    %v1324 = vmul.f32 %v1322, %v1322
    %v1325 = vmul.f32 %v1323, %v1323
    %v1326 = vsel %vm71, %v1324, 0.0
    %1327 = vadd.xlane.f32.xlu0 %v1326
    %v1328 = vpop.xlane.xlu0 %1327
    %v1329 = vsel %vm71, %v1325, 0.0
    %1330 = vadd.xlane.f32.xlu0 %v1329
    %v1331 = vpop.xlane.xlu0 %1330
    %v1332 = vmul.f32 %v1328, %v84
    %v1333 = vmul.f32 %v1331, %v84
    %v1334 = vadd.f32 %v1332, 1e-12
    %v1335 = vadd.f32 %v1333, 1e-12
    %v1336 = vrsqrt.pop %v1334
    %v1337 = vmul.f32 %v1336, %v1334
    %v1338 = vmul.f32 %v1337, %v1336
    %v1339 = vmul.f32 0.5, %v1338
    %v1340 = vsub.f32 1.5, %v1339
    %v1341 = vmul.f32 %v1336, %v1340
    %vm1342 = vweird.f32 %v1334
    %vm1343 = vweird.f32 %v1336
    %vm1344 = vmor %vm1342, %vm1343
    %v1345 = vsel %vm1344, %v1336, %v1341
    %v1346 = vrsqrt.pop %v1335
    %v1347 = vmul.f32 %v1346, %v1335
    %v1348 = vmul.f32 %v1347, %v1346
    %v1349 = vmul.f32 0.5, %v1348
    %v1350 = vsub.f32 1.5, %v1349
    %v1351 = vmul.f32 %v1346, %v1350
    %vm1352 = vweird.f32 %v1335
    %vm1353 = vweird.f32 %v1346
    %vm1354 = vmor %vm1352, %vm1353
    %v1355 = vsel %vm1354, %v1346, %v1351
    %v1356 = vmul.f32 %v1322, %v1345
    %v1357 = vmul.f32 %v1323, %v1355
    %v1359 = vperm.slane %v1311, 0
    %v1361 = vmul.f32 %v1356, %v1359
    %v1362 = vmul.f32 %v1357, %v1359
    %v1364 = vperm.slane %v1313, 0
    %v1366 = vadd.f32 %v1361, %v1364
    %v1367 = vadd.f32 %v1362, %v1364
    %v1369 = vrot.slane %v1367, 7
    %vm1371 = vcmask 1040384
    %v1372 = vsel %vm1371, %v1366, %v1369
    %v1373 = vld [vmem:[%s16] sm:$0xff]
    %v1374 = vld [vmem:[%s16 + $0x8] sm:$0xff]
    %v1375 = vld [vmem:[%s16 + $0x10] sm:$0xff]
    %v1376 = vld [vmem:[%s16 + $0x18] sm:$0xff]
    %v1377 = vld [vmem:[%s17] sm:$0x1]
    %v1379 = vperm.slane %v1377, 0
    %v1382 = vsel %vm71, %v1372, 0
    %1384 = vmatpush.msra.mxu0 0.0
    %1385 = vmatpush.msra.mxu0 0.0
    %1386 = vmatpush.msra.mxu0 0.0
    %1387 = vmatpush.msra.mxu0 0.0
    %1388 = vmatpush.msra.mxu0 0.0
    %1389 = vmatpush.msra.mxu0 0.0
    %1390 = vmatpush.msra.mxu0 0.0
    %1391 = vmatpush.msra.mxu0 0.0
    %1392 = vmatpush.msra.mxu0 0.0
    %1393 = vmatpush.msra.mxu0 0.0
    %1394 = vmatpush.msra.mxu0 0.0
    %1395 = vmatpush.msra.mxu0 0.0
    %1396 = vmatpush.msra.mxu0 %v1376
    %1397 = vmatpush.msra.mxu0 %v1375
    %1398 = vmatpush.msra.mxu0 %v1374
    %1399 = vmatpush.msra.mxu0 %v1373
    %1400 = vmatmul.f32.gmra.mxu0 %v1382
    %v1401 = vpop.f32.mrf.mxu0
    %v1402 = vadd.f32 %v1379, %v1401
    %1403 = vdwg.mxu0
    %v1404 = vtanh.pop %v1402
    %v1405 = vld [vmem:[%s18] sm:$0xff]
    %v1406 = vld [vmem:[%s18 + $0x8] sm:$0xff]
    %v1407 = vld [vmem:[%s18 + $0x10] sm:$0xff]
    %v1408 = vld [vmem:[%s18 + $0x18] sm:$0xff]
    %v1409 = vld [vmem:[%s19] sm:$0x1]
    %v1411 = vperm.slane %v1409, 0
    %v1414 = vsel %vm71, %v1404, 0
    %1416 = vmatpush.msra.mxu0 0.0
    %1417 = vmatpush.msra.mxu0 0.0
    %1418 = vmatpush.msra.mxu0 0.0
    %1419 = vmatpush.msra.mxu0 0.0
    %1420 = vmatpush.msra.mxu0 0.0
    %1421 = vmatpush.msra.mxu0 0.0
    %1422 = vmatpush.msra.mxu0 0.0
    %1423 = vmatpush.msra.mxu0 0.0
    %1424 = vmatpush.msra.mxu0 0.0
    %1425 = vmatpush.msra.mxu0 0.0
    %1426 = vmatpush.msra.mxu0 0.0
    %1427 = vmatpush.msra.mxu0 0.0
    %1428 = vmatpush.msra.mxu0 %v1408
    %1429 = vmatpush.msra.mxu0 %v1407
    %1430 = vmatpush.msra.mxu0 %v1406
    %1431 = vmatpush.msra.mxu0 %v1405
    %1432 = vmatmul.f32.gmra.mxu0 %v1414
    %v1433 = vpop.f32.mrf.mxu0
    %v1434 = vadd.f32 %v1411, %v1433
    %1435 = vdwg.mxu0
    %1436 = vst [vmem:[#allocation2] sm:$0x3] %v1434
    // Predicated region
    $region82: #{bert_base_uncased_forward.1} parent=1 // pred_check
      _
    $region83: #{bert_base_uncased_forward.1} parent=1 // pred_check_branch
      %1438 = sbr.rel (0) target = $region85
    $region84: #{bert_base_uncased_forward.1} parent=1 // pred_region
      %1440 = vsyncadd [#allocation3], 0
      %s1442 = sshll.u32 [#allocation2], 4
      %s1443 = int_to_ptr.vmem [resolvable:$true] %s1442
      %s1444 = sshll.u32 %s20, 4
      %s1445 = int_to_ptr.hbm [resolvable:$true] %s1444
      %1447 = dma.vmem_to_hbm [thread:$0]  %s1443, 32, %s1445, [#allocation3]
    $region85: #{bert_base_uncased_forward.1} parent=1 // pred_fallthru
      _
    // Predicated region
    $region86: #{bert_base_uncased_forward.1} parent=1 // pred_check
      _
    $region87: #{bert_base_uncased_forward.1} parent=1 // pred_check_branch
      %1449 = sbr.rel (0) target = $region89
    $region88: #{bert_base_uncased_forward.1} parent=1 // pred_region
      %1451 = dma.done [#allocation3], 32
    $region89: #{bert_base_uncased_forward.1} parent=1 // pred_fallthru
      _
    %1452 = vsyncpa [#allocation3], 1

</llo_original>
